<compile_context>
chip_gen: v5e
topology: v5e:2x2
jax: 0.10.0
libtpu: 0.0.40
codegen_flags: <defaults>
</compile_context>

<pallas_src>
import jax
import jax.numpy as jnp
from jax.experimental import pallas as pl
from jax.experimental.pallas import tpu as pltpu


def _make_kernel(n_layers, T, B, H):
    def kernel(*refs):
        x_ref = refs[0]                                  # (T*B, D_in)
        wrefs = refs[1:1 + 3 * n_layers]
        wfc_ref = refs[1 + 3 * n_layers]                 # (H, S_pad) lane-dense
        bfc_ref = refs[2 + 3 * n_layers]                 # (1, S_pad)
        out_ref = refs[3 + 3 * n_layers]                 # (T*B, S_pad)
        h_scr = refs[4 + 3 * n_layers]                   # VMEM scratch (T*B, H)

        # Lane-constant affine turning one full-width tanh into
        # sigmoid on (i,f,o) lanes + tanh on g lanes.  The 0.5 input scaling
        # for the (i,f,o) lanes is already baked into the packed weights, so:
        #   act = tanh(raw) * a_vec + b_vec
        a_vec = jnp.concatenate([jnp.full((1, 3 * H), 0.5, jnp.float32),
                                 jnp.ones((1, H), jnp.float32)], axis=-1)
        b_vec = jnp.concatenate([jnp.full((1, 3 * H), 0.5, jnp.float32),
                                 jnp.zeros((1, H), jnp.float32)], axis=-1)

        seq = x_ref[...]                                 # (T*B, D_l)
        for l in range(n_layers):
            wih = wrefs[3 * l][...]                      # (D_l, 4H) packed (i,f,o,g)
            whh = wrefs[3 * l + 1][...]                  # (H, 4H)
            bias = wrefs[3 * l + 2][...]                 # (1, 4H)

            # Hoisted input projection + bias: one lane-dense matmul per layer.
            xproj = jnp.dot(seq, wih,
                            preferred_element_type=jnp.float32) + bias   # (T*B, 4H)

            h = jnp.zeros((B, H), jnp.float32)
            c = jnp.zeros((B, H), jnp.float32)
            for t in range(T):                           # static unrolled time loop
                # single MXU matmul per step on the serial chain
                gates = xproj[t * B:(t + 1) * B] + jnp.dot(
                    h, whh, preferred_element_type=jnp.float32)          # (B, 4H)
                act = jnp.tanh(gates) * a_vec + b_vec    # one EUP pass over full vreg
                i_g = act[:, :H]
                f_g = act[:, H:2 * H]
                o_g = act[:, 2 * H:3 * H]
                g_g = act[:, 3 * H:]
                c = f_g * c + i_g * g_g
                h = o_g * jnp.tanh(c)
                h_scr[t * B:(t + 1) * B, :] = h          # per-step store, no stack
            seq = h_scr[...]                             # (T*B, H) for next layer / FC
            # TODO(synk): inter-layer LSTM dropout and the output nn.Dropout are
            # identity in eval/inference mode; train-time dropout not implemented.

        # Fused + lane-padded FC heads: one matmul, one unmasked lane-dense store.
        out_ref[...] = jnp.dot(seq, wfc_ref[...],
                               preferred_element_type=jnp.float32) + bfc_ref[...]

    return kernel


def _pack_lstm_layer(lp):
    """PyTorch gate order (i, f, g, o) -> packed lane order (i, f, o, g).
    (i, f, o) lane blocks are pre-scaled by 0.5 so a single full-width tanh +
    lane-constant affine implements sigmoid|tanh inside the kernel."""
    wih, whh, b = lp['wih'], lp['whh'], lp['b']
    order = (0, 1, 3, 2)
    wih_p = jnp.concatenate([wih[k] for k in order], axis=-1)   # (D_l, 4H)
    whh_p = jnp.concatenate([whh[k] for k in order], axis=-1)   # (H, 4H)
    b_p = jnp.concatenate([b[k] for k in order], axis=-1)       # (1, 4H)
    H = whh.shape[-1]
    scale = jnp.concatenate([jnp.full((3 * H,), 0.5, jnp.float32),
                             jnp.ones((H,), jnp.float32)])
    return wih_p * scale, whh_p * scale, b_p * scale


def lstm_baseline_forward(x, params):
    """x: (B, T, input_size) batch_first, float32. Returns (y, z, zeros_like(y))."""
    B, T, D_in = x.shape
    n_layers = len(params['lstm'])
    H = params['lstm'][0]['whh'].shape[-1]
    S1 = params['fc1_w'].shape[-1]
    S2 = params['fc2_w'].shape[-1]
    S_total = S1 + S2
    S_pad = max(128, ((S_total + 127) // 128) * 128)   # lane-dense output slab

    # time-major, flattened to (T*B, D_in) on the host side (no in-kernel reshape)
    x_flat = jnp.transpose(x, (1, 0, 2)).reshape(T * B, D_in)

    flat = [x_flat]
    for lp in params['lstm']:
        flat += list(_pack_lstm_layer(lp))

    wfc = jnp.concatenate([params['fc1_w'], params['fc2_w']], axis=-1)  # (H, S_total)
    bfc = jnp.concatenate([params['fc1_b'], params['fc2_b']], axis=-1)  # (1, S_total)
    wfc = jnp.pad(wfc, ((0, 0), (0, S_pad - S_total)))                  # (H, S_pad)
    bfc = jnp.pad(bfc, ((0, 0), (0, S_pad - S_total)))                  # (1, S_pad)
    flat += [wfc, bfc]

    kernel = _make_kernel(n_layers, T, B, H)
    vmem = pl.BlockSpec(memory_space=pltpu.MemorySpace.VMEM)

    out_flat = pl.pallas_call(
        kernel,
        out_shape=jax.ShapeDtypeStruct((T * B, S_pad), jnp.float32),
        in_specs=[vmem] * len(flat),
        out_specs=vmem,
        scratch_shapes=[pltpu.VMEM((T * B, H), jnp.float32)],
    )(*flat)

    out = jnp.transpose(out_flat.reshape(T, B, S_pad), (1, 0, 2))   # (B, T, S_pad)
    y = out[..., :S1]
    z = out[..., S1:S_total]
    return y, z, jnp.zeros_like(y)


def init_params(key, input_size, hidden_dim, n_layers, stiffness_outputs,
                shape_outputs):
    params = {'lstm': []}
    d_in = input_size
    scale = 1.0 / jnp.sqrt(hidden_dim)
    for _ in range(n_layers):
        key, k1, k2, k3 = jax.random.split(key, 4)
        params['lstm'].append({
            'wih': scale * jax.random.normal(k1, (4, d_in, hidden_dim), jnp.float32),
            'whh': scale * jax.random.normal(k2, (4, hidden_dim, hidden_dim), jnp.float32),
            'b': scale * jax.random.normal(k3, (4, 1, hidden_dim), jnp.float32),
        })
        d_in = hidden_dim
    key, k1, k2, k3, k4 = jax.random.split(key, 5)
    params['fc1_w'] = scale * jax.random.normal(k1, (hidden_dim, stiffness_outputs), jnp.float32)
    params['fc1_b'] = scale * jax.random.normal(k2, (1, stiffness_outputs), jnp.float32)
    params['fc2_w'] = scale * jax.random.normal(k3, (hidden_dim, shape_outputs), jnp.float32)
    params['fc2_b'] = scale * jax.random.normal(k4, (1, shape_outputs), jnp.float32)
    return params


def reference_forward(x, params):
    """Pure-JAX reference with identical LSTM semantics (eval mode, PyTorch gate order)."""
    B, T, _ = x.shape
    seq = jnp.transpose(x, (1, 0, 2))
    for lp in params['lstm']:
        wih, whh, b = lp['wih'], lp['whh'], lp['b']
        H = whh.shape[-1]
        h = jnp.zeros((B, H), jnp.float32)
        c = jnp.zeros((B, H), jnp.float32)
        outs = []
        for t in range(T):
            x_t = seq[t]
            gates = [x_t @ wih[k] + h @ whh[k] + b[k] for k in range(4)]
            i = jax.nn.sigmoid(gates[0])
            f = jax.nn.sigmoid(gates[1])
            g = jnp.tanh(gates[2])
            o = jax.nn.sigmoid(gates[3])
            c = f * c + i * g
            h = o * jnp.tanh(c)
            outs.append(h)
        seq = jnp.stack(outs, axis=0)
    hs = seq.reshape(T * B, -1)
    y = (hs @ params['fc1_w'] + params['fc1_b']).reshape(T, B, -1)
    z = (hs @ params['fc2_w'] + params['fc2_b']).reshape(T, B, -1)
    return (jnp.transpose(y, (1, 0, 2)), jnp.transpose(z, (1, 0, 2)))


if __name__ == "__main__":
    # Small shapes consistent with LSTM_Baseline's forward:
    B, T = 2, 8
    input_size, hidden_dim, n_layers = 16, 32, 2
    stiffness_outputs, shape_outputs = 8, 4

    key = jax.random.PRNGKey(0)
    key, kx, kp = jax.random.split(key, 3)
    x = jax.random.normal(kx, (B, T, input_size), jnp.float32)
    params = init_params(kp, input_size, hidden_dim, n_layers,
                         stiffness_outputs, shape_outputs)

    y, z, zeros = lstm_baseline_forward(x, params)
    jax.block_until_ready((y, z, zeros))

    y_ref, z_ref = reference_forward(x, params)
    assert y.shape == (B, T, stiffness_outputs)
    assert z.shape == (B, T, shape_outputs)
    assert zeros.shape == y.shape
    assert jnp.allclose(y, y_ref, atol=1e-5, rtol=1e-5)
    assert jnp.allclose(z, z_ref, atol=1e-5, rtol=1e-5)
    assert bool(jnp.all(zeros == 0))

    print("KERNEL_OK")
</pallas_src>

<mosaic_0001>
module attributes {stable_mosaic.version = 11 : i64} {
  func.func @kernel(%arg0: memref<16x16xf32, #tpu.memory_space<vmem>>, %arg1: memref<16x128xf32, #tpu.memory_space<vmem>>, %arg2: memref<32x128xf32, #tpu.memory_space<vmem>>, %arg3: memref<1x128xf32, #tpu.memory_space<vmem>>, %arg4: memref<32x128xf32, #tpu.memory_space<vmem>>, %arg5: memref<32x128xf32, #tpu.memory_space<vmem>>, %arg6: memref<1x128xf32, #tpu.memory_space<vmem>>, %arg7: memref<32x128xf32, #tpu.memory_space<vmem>>, %arg8: memref<1x128xf32, #tpu.memory_space<vmem>>, %arg9: memref<16x128xf32, #tpu.memory_space<vmem>>, %arg10: memref<16x32xf32, #tpu.memory_space<vmem>>) attributes {dimension_semantics = [], scalar_prefetch = 0 : i64, scratch_operands = 1 : i64, tpu.core_type = #tpu.core_type<tc>} {
    %cst = arith.constant 5.000000e-01 : f32
    %0 = vector.broadcast %cst : f32 to vector<1x96xf32>
    %cst_0 = arith.constant 1.000000e+00 : f32
    %1 = vector.broadcast %cst_0 : f32 to vector<1x32xf32>
    %2 = tpu.concatenate %0, %1 in 1 : vector<1x96xf32>, vector<1x32xf32> -> vector<1x128xf32>
    %cst_1 = arith.constant 5.000000e-01 : f32
    %3 = vector.broadcast %cst_1 : f32 to vector<1x96xf32>
    %cst_2 = arith.constant 0.000000e+00 : f32
    %4 = vector.broadcast %cst_2 : f32 to vector<1x32xf32>
    %5 = tpu.concatenate %3, %4 in 1 : vector<1x96xf32>, vector<1x32xf32> -> vector<1x128xf32>
    %c0 = arith.constant 0 : index
    %c0_3 = arith.constant 0 : index
    %6 = vector.load %arg0[%c0, %c0_3] : memref<16x16xf32, #tpu.memory_space<vmem>>, vector<16x16xf32>
    %c0_4 = arith.constant 0 : index
    %c0_5 = arith.constant 0 : index
    %7 = vector.load %arg1[%c0_4, %c0_5] : memref<16x128xf32, #tpu.memory_space<vmem>>, vector<16x128xf32>
    %c0_6 = arith.constant 0 : index
    %c0_7 = arith.constant 0 : index
    %8 = vector.load %arg2[%c0_6, %c0_7] : memref<32x128xf32, #tpu.memory_space<vmem>>, vector<32x128xf32>
    %c0_8 = arith.constant 0 : index
    %c0_9 = arith.constant 0 : index
    %9 = vector.load %arg3[%c0_8, %c0_9] : memref<1x128xf32, #tpu.memory_space<vmem>>, vector<1x128xf32>
    %cst_10 = arith.constant dense<0.000000e+00> : vector<16x128xf32>
    %10 = tpu.matmul %6, %7, %cst_10 {dimension_numbers = #tpu.dot_dimension_numbers<[1], [0], [0], [1], [0, 0, 1, 1], [], []>} : vector<16x16xf32>, vector<16x128xf32>, vector<16x128xf32> -> vector<16x128xf32>
    %11 = vector.broadcast %9 : vector<1x128xf32> to vector<16x128xf32>
    %12 = arith.addf %10, %11 : vector<16x128xf32>
    %cst_11 = arith.constant 0.000000e+00 : f32
    %13 = vector.broadcast %cst_11 : f32 to vector<2x32xf32>
    %cst_12 = arith.constant 0.000000e+00 : f32
    %14 = vector.broadcast %cst_12 : f32 to vector<2x32xf32>
    %15 = vector.extract_strided_slice %12 {offsets = [0, 0], sizes = [2, 128], strides = [1, 1]} : vector<16x128xf32> to vector<2x128xf32>
    %cst_13 = arith.constant dense<0.000000e+00> : vector<2x128xf32>
    %16 = tpu.matmul %13, %8, %cst_13 {dimension_numbers = #tpu.dot_dimension_numbers<[1], [0], [0], [1], [0, 0, 1, 1], [], []>} : vector<2x32xf32>, vector<32x128xf32>, vector<2x128xf32> -> vector<2x128xf32>
    %17 = arith.addf %15, %16 : vector<2x128xf32>
    %18 = math.tanh %17 : vector<2x128xf32>
    %19 = vector.broadcast %2 : vector<1x128xf32> to vector<2x128xf32>
    %20 = arith.mulf %18, %19 : vector<2x128xf32>
    %21 = vector.broadcast %5 : vector<1x128xf32> to vector<2x128xf32>
    %22 = arith.addf %20, %21 : vector<2x128xf32>
    %23 = vector.extract_strided_slice %22 {offsets = [0, 0], sizes = [2, 32], strides = [1, 1]} : vector<2x128xf32> to vector<2x32xf32>
    %24 = vector.extract_strided_slice %22 {offsets = [0, 32], sizes = [2, 32], strides = [1, 1]} : vector<2x128xf32> to vector<2x32xf32>
    %25 = vector.extract_strided_slice %22 {offsets = [0, 64], sizes = [2, 32], strides = [1, 1]} : vector<2x128xf32> to vector<2x32xf32>
    %26 = vector.extract_strided_slice %22 {offsets = [0, 96], sizes = [2, 32], strides = [1, 1]} : vector<2x128xf32> to vector<2x32xf32>
    %27 = arith.mulf %24, %14 : vector<2x32xf32>
    %28 = arith.mulf %23, %26 : vector<2x32xf32>
    %29 = arith.addf %27, %28 : vector<2x32xf32>
    %30 = math.tanh %29 : vector<2x32xf32>
    %31 = arith.mulf %25, %30 : vector<2x32xf32>
    %c0_14 = arith.constant 0 : index
    %c0_15 = arith.constant 0 : index
    %32 = vector.load %arg10[%c0_14, %c0_15] : memref<16x32xf32, #tpu.memory_space<vmem>>, vector<2x32xf32>
    tpu.vector_store %arg10[%c0_14, %c0_15], %31 {strides = array<i32>} : memref<16x32xf32, #tpu.memory_space<vmem>>, vector<2x32xf32>,
    %33 = vector.extract_strided_slice %12 {offsets = [2, 0], sizes = [2, 128], strides = [1, 1]} : vector<16x128xf32> to vector<2x128xf32>
    %cst_16 = arith.constant dense<0.000000e+00> : vector<2x128xf32>
    %34 = tpu.matmul %31, %8, %cst_16 {dimension_numbers = #tpu.dot_dimension_numbers<[1], [0], [0], [1], [0, 0, 1, 1], [], []>} : vector<2x32xf32>, vector<32x128xf32>, vector<2x128xf32> -> vector<2x128xf32>
    %35 = arith.addf %33, %34 : vector<2x128xf32>
    %36 = math.tanh %35 : vector<2x128xf32>
    %37 = vector.broadcast %2 : vector<1x128xf32> to vector<2x128xf32>
    %38 = arith.mulf %36, %37 : vector<2x128xf32>
    %39 = vector.broadcast %5 : vector<1x128xf32> to vector<2x128xf32>
    %40 = arith.addf %38, %39 : vector<2x128xf32>
    %41 = vector.extract_strided_slice %40 {offsets = [0, 0], sizes = [2, 32], strides = [1, 1]} : vector<2x128xf32> to vector<2x32xf32>
    %42 = vector.extract_strided_slice %40 {offsets = [0, 32], sizes = [2, 32], strides = [1, 1]} : vector<2x128xf32> to vector<2x32xf32>
    %43 = vector.extract_strided_slice %40 {offsets = [0, 64], sizes = [2, 32], strides = [1, 1]} : vector<2x128xf32> to vector<2x32xf32>
    %44 = vector.extract_strided_slice %40 {offsets = [0, 96], sizes = [2, 32], strides = [1, 1]} : vector<2x128xf32> to vector<2x32xf32>
    %45 = arith.mulf %42, %29 : vector<2x32xf32>
    %46 = arith.mulf %41, %44 : vector<2x32xf32>
    %47 = arith.addf %45, %46 : vector<2x32xf32>
    %48 = math.tanh %47 : vector<2x32xf32>
    %49 = arith.mulf %43, %48 : vector<2x32xf32>
    %c2 = arith.constant 2 : index
    %c0_17 = arith.constant 0 : index
    %50 = vector.load %arg10[%c2, %c0_17] : memref<16x32xf32, #tpu.memory_space<vmem>>, vector<2x32xf32>
    tpu.vector_store %arg10[%c2, %c0_17], %49 {strides = array<i32>} : memref<16x32xf32, #tpu.memory_space<vmem>>, vector<2x32xf32>,
    %51 = vector.extract_strided_slice %12 {offsets = [4, 0], sizes = [2, 128], strides = [1, 1]} : vector<16x128xf32> to vector<2x128xf32>
    %cst_18 = arith.constant dense<0.000000e+00> : vector<2x128xf32>
    %52 = tpu.matmul %49, %8, %cst_18 {dimension_numbers = #tpu.dot_dimension_numbers<[1], [0], [0], [1], [0, 0, 1, 1], [], []>} : vector<2x32xf32>, vector<32x128xf32>, vector<2x128xf32> -> vector<2x128xf32>
    %53 = arith.addf %51, %52 : vector<2x128xf32>
    %54 = math.tanh %53 : vector<2x128xf32>
    %55 = vector.broadcast %2 : vector<1x128xf32> to vector<2x128xf32>
    %56 = arith.mulf %54, %55 : vector<2x128xf32>
    %57 = vector.broadcast %5 : vector<1x128xf32> to vector<2x128xf32>
    %58 = arith.addf %56, %57 : vector<2x128xf32>
    %59 = vector.extract_strided_slice %58 {offsets = [0, 0], sizes = [2, 32], strides = [1, 1]} : vector<2x128xf32> to vector<2x32xf32>
    %60 = vector.extract_strided_slice %58 {offsets = [0, 32], sizes = [2, 32], strides = [1, 1]} : vector<2x128xf32> to vector<2x32xf32>
    %61 = vector.extract_strided_slice %58 {offsets = [0, 64], sizes = [2, 32], strides = [1, 1]} : vector<2x128xf32> to vector<2x32xf32>
    %62 = vector.extract_strided_slice %58 {offsets = [0, 96], sizes = [2, 32], strides = [1, 1]} : vector<2x128xf32> to vector<2x32xf32>
    %63 = arith.mulf %60, %47 : vector<2x32xf32>
    %64 = arith.mulf %59, %62 : vector<2x32xf32>
    %65 = arith.addf %63, %64 : vector<2x32xf32>
    %66 = math.tanh %65 : vector<2x32xf32>
    %67 = arith.mulf %61, %66 : vector<2x32xf32>
    %c4 = arith.constant 4 : index
    %c0_19 = arith.constant 0 : index
    %68 = vector.load %arg10[%c4, %c0_19] : memref<16x32xf32, #tpu.memory_space<vmem>>, vector<2x32xf32>
    tpu.vector_store %arg10[%c4, %c0_19], %67 {strides = array<i32>} : memref<16x32xf32, #tpu.memory_space<vmem>>, vector<2x32xf32>,
    %69 = vector.extract_strided_slice %12 {offsets = [6, 0], sizes = [2, 128], strides = [1, 1]} : vector<16x128xf32> to vector<2x128xf32>
    %cst_20 = arith.constant dense<0.000000e+00> : vector<2x128xf32>
    %70 = tpu.matmul %67, %8, %cst_20 {dimension_numbers = #tpu.dot_dimension_numbers<[1], [0], [0], [1], [0, 0, 1, 1], [], []>} : vector<2x32xf32>, vector<32x128xf32>, vector<2x128xf32> -> vector<2x128xf32>
    %71 = arith.addf %69, %70 : vector<2x128xf32>
    %72 = math.tanh %71 : vector<2x128xf32>
    %73 = vector.broadcast %2 : vector<1x128xf32> to vector<2x128xf32>
    %74 = arith.mulf %72, %73 : vector<2x128xf32>
    %75 = vector.broadcast %5 : vector<1x128xf32> to vector<2x128xf32>
    %76 = arith.addf %74, %75 : vector<2x128xf32>
    %77 = vector.extract_strided_slice %76 {offsets = [0, 0], sizes = [2, 32], strides = [1, 1]} : vector<2x128xf32> to vector<2x32xf32>
    %78 = vector.extract_strided_slice %76 {offsets = [0, 32], sizes = [2, 32], strides = [1, 1]} : vector<2x128xf32> to vector<2x32xf32>
    %79 = vector.extract_strided_slice %76 {offsets = [0, 64], sizes = [2, 32], strides = [1, 1]} : vector<2x128xf32> to vector<2x32xf32>
    %80 = vector.extract_strided_slice %76 {offsets = [0, 96], sizes = [2, 32], strides = [1, 1]} : vector<2x128xf32> to vector<2x32xf32>
    %81 = arith.mulf %78, %65 : vector<2x32xf32>
    %82 = arith.mulf %77, %80 : vector<2x32xf32>
    %83 = arith.addf %81, %82 : vector<2x32xf32>
    %84 = math.tanh %83 : vector<2x32xf32>
    %85 = arith.mulf %79, %84 : vector<2x32xf32>
    %c6 = arith.constant 6 : index
    %c0_21 = arith.constant 0 : index
    %86 = vector.load %arg10[%c6, %c0_21] : memref<16x32xf32, #tpu.memory_space<vmem>>, vector<2x32xf32>
    tpu.vector_store %arg10[%c6, %c0_21], %85 {strides = array<i32>} : memref<16x32xf32, #tpu.memory_space<vmem>>, vector<2x32xf32>,
    %87 = vector.extract_strided_slice %12 {offsets = [8, 0], sizes = [2, 128], strides = [1, 1]} : vector<16x128xf32> to vector<2x128xf32>
    %cst_22 = arith.constant dense<0.000000e+00> : vector<2x128xf32>
    %88 = tpu.matmul %85, %8, %cst_22 {dimension_numbers = #tpu.dot_dimension_numbers<[1], [0], [0], [1], [0, 0, 1, 1], [], []>} : vector<2x32xf32>, vector<32x128xf32>, vector<2x128xf32> -> vector<2x128xf32>
    %89 = arith.addf %87, %88 : vector<2x128xf32>
    %90 = math.tanh %89 : vector<2x128xf32>
    %91 = vector.broadcast %2 : vector<1x128xf32> to vector<2x128xf32>
    %92 = arith.mulf %90, %91 : vector<2x128xf32>
    %93 = vector.broadcast %5 : vector<1x128xf32> to vector<2x128xf32>
    %94 = arith.addf %92, %93 : vector<2x128xf32>
    %95 = vector.extract_strided_slice %94 {offsets = [0, 0], sizes = [2, 32], strides = [1, 1]} : vector<2x128xf32> to vector<2x32xf32>
    %96 = vector.extract_strided_slice %94 {offsets = [0, 32], sizes = [2, 32], strides = [1, 1]} : vector<2x128xf32> to vector<2x32xf32>
    %97 = vector.extract_strided_slice %94 {offsets = [0, 64], sizes = [2, 32], strides = [1, 1]} : vector<2x128xf32> to vector<2x32xf32>
    %98 = vector.extract_strided_slice %94 {offsets = [0, 96], sizes = [2, 32], strides = [1, 1]} : vector<2x128xf32> to vector<2x32xf32>
    %99 = arith.mulf %96, %83 : vector<2x32xf32>
    %100 = arith.mulf %95, %98 : vector<2x32xf32>
    %101 = arith.addf %99, %100 : vector<2x32xf32>
    %102 = math.tanh %101 : vector<2x32xf32>
    %103 = arith.mulf %97, %102 : vector<2x32xf32>
    %c8 = arith.constant 8 : index
    %c0_23 = arith.constant 0 : index
    %104 = vector.load %arg10[%c8, %c0_23] : memref<16x32xf32, #tpu.memory_space<vmem>>, vector<2x32xf32>
    tpu.vector_store %arg10[%c8, %c0_23], %103 {strides = array<i32>} : memref<16x32xf32, #tpu.memory_space<vmem>>, vector<2x32xf32>,
    %105 = vector.extract_strided_slice %12 {offsets = [10, 0], sizes = [2, 128], strides = [1, 1]} : vector<16x128xf32> to vector<2x128xf32>
    %cst_24 = arith.constant dense<0.000000e+00> : vector<2x128xf32>
    %106 = tpu.matmul %103, %8, %cst_24 {dimension_numbers = #tpu.dot_dimension_numbers<[1], [0], [0], [1], [0, 0, 1, 1], [], []>} : vector<2x32xf32>, vector<32x128xf32>, vector<2x128xf32> -> vector<2x128xf32>
    %107 = arith.addf %105, %106 : vector<2x128xf32>
    %108 = math.tanh %107 : vector<2x128xf32>
    %109 = vector.broadcast %2 : vector<1x128xf32> to vector<2x128xf32>
    %110 = arith.mulf %108, %109 : vector<2x128xf32>
    %111 = vector.broadcast %5 : vector<1x128xf32> to vector<2x128xf32>
    %112 = arith.addf %110, %111 : vector<2x128xf32>
    %113 = vector.extract_strided_slice %112 {offsets = [0, 0], sizes = [2, 32], strides = [1, 1]} : vector<2x128xf32> to vector<2x32xf32>
    %114 = vector.extract_strided_slice %112 {offsets = [0, 32], sizes = [2, 32], strides = [1, 1]} : vector<2x128xf32> to vector<2x32xf32>
    %115 = vector.extract_strided_slice %112 {offsets = [0, 64], sizes = [2, 32], strides = [1, 1]} : vector<2x128xf32> to vector<2x32xf32>
    %116 = vector.extract_strided_slice %112 {offsets = [0, 96], sizes = [2, 32], strides = [1, 1]} : vector<2x128xf32> to vector<2x32xf32>
    %117 = arith.mulf %114, %101 : vector<2x32xf32>
    %118 = arith.mulf %113, %116 : vector<2x32xf32>
    %119 = arith.addf %117, %118 : vector<2x32xf32>
    %120 = math.tanh %119 : vector<2x32xf32>
    %121 = arith.mulf %115, %120 : vector<2x32xf32>
    %c10 = arith.constant 10 : index
    %c0_25 = arith.constant 0 : index
    %122 = vector.load %arg10[%c10, %c0_25] : memref<16x32xf32, #tpu.memory_space<vmem>>, vector<2x32xf32>
    tpu.vector_store %arg10[%c10, %c0_25], %121 {strides = array<i32>} : memref<16x32xf32, #tpu.memory_space<vmem>>, vector<2x32xf32>,
    %123 = vector.extract_strided_slice %12 {offsets = [12, 0], sizes = [2, 128], strides = [1, 1]} : vector<16x128xf32> to vector<2x128xf32>
    %cst_26 = arith.constant dense<0.000000e+00> : vector<2x128xf32>
    %124 = tpu.matmul %121, %8, %cst_26 {dimension_numbers = #tpu.dot_dimension_numbers<[1], [0], [0], [1], [0, 0, 1, 1], [], []>} : vector<2x32xf32>, vector<32x128xf32>, vector<2x128xf32> -> vector<2x128xf32>
    %125 = arith.addf %123, %124 : vector<2x128xf32>
    %126 = math.tanh %125 : vector<2x128xf32>
    %127 = vector.broadcast %2 : vector<1x128xf32> to vector<2x128xf32>
    %128 = arith.mulf %126, %127 : vector<2x128xf32>
    %129 = vector.broadcast %5 : vector<1x128xf32> to vector<2x128xf32>
    %130 = arith.addf %128, %129 : vector<2x128xf32>
    %131 = vector.extract_strided_slice %130 {offsets = [0, 0], sizes = [2, 32], strides = [1, 1]} : vector<2x128xf32> to vector<2x32xf32>
    %132 = vector.extract_strided_slice %130 {offsets = [0, 32], sizes = [2, 32], strides = [1, 1]} : vector<2x128xf32> to vector<2x32xf32>
    %133 = vector.extract_strided_slice %130 {offsets = [0, 64], sizes = [2, 32], strides = [1, 1]} : vector<2x128xf32> to vector<2x32xf32>
    %134 = vector.extract_strided_slice %130 {offsets = [0, 96], sizes = [2, 32], strides = [1, 1]} : vector<2x128xf32> to vector<2x32xf32>
    %135 = arith.mulf %132, %119 : vector<2x32xf32>
    %136 = arith.mulf %131, %134 : vector<2x32xf32>
    %137 = arith.addf %135, %136 : vector<2x32xf32>
    %138 = math.tanh %137 : vector<2x32xf32>
    %139 = arith.mulf %133, %138 : vector<2x32xf32>
    %c12 = arith.constant 12 : index
    %c0_27 = arith.constant 0 : index
    %140 = vector.load %arg10[%c12, %c0_27] : memref<16x32xf32, #tpu.memory_space<vmem>>, vector<2x32xf32>
    tpu.vector_store %arg10[%c12, %c0_27], %139 {strides = array<i32>} : memref<16x32xf32, #tpu.memory_space<vmem>>, vector<2x32xf32>,
    %141 = vector.extract_strided_slice %12 {offsets = [14, 0], sizes = [2, 128], strides = [1, 1]} : vector<16x128xf32> to vector<2x128xf32>
    %cst_28 = arith.constant dense<0.000000e+00> : vector<2x128xf32>
    %142 = tpu.matmul %139, %8, %cst_28 {dimension_numbers = #tpu.dot_dimension_numbers<[1], [0], [0], [1], [0, 0, 1, 1], [], []>} : vector<2x32xf32>, vector<32x128xf32>, vector<2x128xf32> -> vector<2x128xf32>
    %143 = arith.addf %141, %142 : vector<2x128xf32>
    %144 = math.tanh %143 : vector<2x128xf32>
    %145 = vector.broadcast %2 : vector<1x128xf32> to vector<2x128xf32>
    %146 = arith.mulf %144, %145 : vector<2x128xf32>
    %147 = vector.broadcast %5 : vector<1x128xf32> to vector<2x128xf32>
    %148 = arith.addf %146, %147 : vector<2x128xf32>
    %149 = vector.extract_strided_slice %148 {offsets = [0, 0], sizes = [2, 32], strides = [1, 1]} : vector<2x128xf32> to vector<2x32xf32>
    %150 = vector.extract_strided_slice %148 {offsets = [0, 32], sizes = [2, 32], strides = [1, 1]} : vector<2x128xf32> to vector<2x32xf32>
    %151 = vector.extract_strided_slice %148 {offsets = [0, 64], sizes = [2, 32], strides = [1, 1]} : vector<2x128xf32> to vector<2x32xf32>
    %152 = vector.extract_strided_slice %148 {offsets = [0, 96], sizes = [2, 32], strides = [1, 1]} : vector<2x128xf32> to vector<2x32xf32>
    %153 = arith.mulf %150, %137 : vector<2x32xf32>
    %154 = arith.mulf %149, %152 : vector<2x32xf32>
    %155 = arith.addf %153, %154 : vector<2x32xf32>
    %156 = math.tanh %155 : vector<2x32xf32>
    %157 = arith.mulf %151, %156 : vector<2x32xf32>
    %c14 = arith.constant 14 : index
    %c0_29 = arith.constant 0 : index
    %158 = vector.load %arg10[%c14, %c0_29] : memref<16x32xf32, #tpu.memory_space<vmem>>, vector<2x32xf32>
    tpu.vector_store %arg10[%c14, %c0_29], %157 {strides = array<i32>} : memref<16x32xf32, #tpu.memory_space<vmem>>, vector<2x32xf32>,
    %c0_30 = arith.constant 0 : index
    %c0_31 = arith.constant 0 : index
    %159 = vector.load %arg10[%c0_30, %c0_31] : memref<16x32xf32, #tpu.memory_space<vmem>>, vector<16x32xf32>
    %c0_32 = arith.constant 0 : index
    %c0_33 = arith.constant 0 : index
    %160 = vector.load %arg4[%c0_32, %c0_33] : memref<32x128xf32, #tpu.memory_space<vmem>>, vector<32x128xf32>
    %c0_34 = arith.constant 0 : index
    %c0_35 = arith.constant 0 : index
    %161 = vector.load %arg5[%c0_34, %c0_35] : memref<32x128xf32, #tpu.memory_space<vmem>>, vector<32x128xf32>
    %c0_36 = arith.constant 0 : index
    %c0_37 = arith.constant 0 : index
    %162 = vector.load %arg6[%c0_36, %c0_37] : memref<1x128xf32, #tpu.memory_space<vmem>>, vector<1x128xf32>
    %cst_38 = arith.constant dense<0.000000e+00> : vector<16x128xf32>
    %163 = tpu.matmul %159, %160, %cst_38 {dimension_numbers = #tpu.dot_dimension_numbers<[1], [0], [0], [1], [0, 0, 1, 1], [], []>} : vector<16x32xf32>, vector<32x128xf32>, vector<16x128xf32> -> vector<16x128xf32>
    %164 = vector.broadcast %162 : vector<1x128xf32> to vector<16x128xf32>
    %165 = arith.addf %163, %164 : vector<16x128xf32>
    %cst_39 = arith.constant 0.000000e+00 : f32
    %166 = vector.broadcast %cst_39 : f32 to vector<2x32xf32>
    %cst_40 = arith.constant 0.000000e+00 : f32
    %167 = vector.broadcast %cst_40 : f32 to vector<2x32xf32>
    %168 = vector.extract_strided_slice %165 {offsets = [0, 0], sizes = [2, 128], strides = [1, 1]} : vector<16x128xf32> to vector<2x128xf32>
    %cst_41 = arith.constant dense<0.000000e+00> : vector<2x128xf32>
    %169 = tpu.matmul %166, %161, %cst_41 {dimension_numbers = #tpu.dot_dimension_numbers<[1], [0], [0], [1], [0, 0, 1, 1], [], []>} : vector<2x32xf32>, vector<32x128xf32>, vector<2x128xf32> -> vector<2x128xf32>
    %170 = arith.addf %168, %169 : vector<2x128xf32>
    %171 = math.tanh %170 : vector<2x128xf32>
    %172 = vector.broadcast %2 : vector<1x128xf32> to vector<2x128xf32>
    %173 = arith.mulf %171, %172 : vector<2x128xf32>
    %174 = vector.broadcast %5 : vector<1x128xf32> to vector<2x128xf32>
    %175 = arith.addf %173, %174 : vector<2x128xf32>
    %176 = vector.extract_strided_slice %175 {offsets = [0, 0], sizes = [2, 32], strides = [1, 1]} : vector<2x128xf32> to vector<2x32xf32>
    %177 = vector.extract_strided_slice %175 {offsets = [0, 32], sizes = [2, 32], strides = [1, 1]} : vector<2x128xf32> to vector<2x32xf32>
    %178 = vector.extract_strided_slice %175 {offsets = [0, 64], sizes = [2, 32], strides = [1, 1]} : vector<2x128xf32> to vector<2x32xf32>
    %179 = vector.extract_strided_slice %175 {offsets = [0, 96], sizes = [2, 32], strides = [1, 1]} : vector<2x128xf32> to vector<2x32xf32>
    %180 = arith.mulf %177, %167 : vector<2x32xf32>
    %181 = arith.mulf %176, %179 : vector<2x32xf32>
    %182 = arith.addf %180, %181 : vector<2x32xf32>
    %183 = math.tanh %182 : vector<2x32xf32>
    %184 = arith.mulf %178, %183 : vector<2x32xf32>
    %c0_42 = arith.constant 0 : index
    %c0_43 = arith.constant 0 : index
    %185 = vector.load %arg10[%c0_42, %c0_43] : memref<16x32xf32, #tpu.memory_space<vmem>>, vector<2x32xf32>
    tpu.vector_store %arg10[%c0_42, %c0_43], %184 {strides = array<i32>} : memref<16x32xf32, #tpu.memory_space<vmem>>, vector<2x32xf32>,
    %186 = vector.extract_strided_slice %165 {offsets = [2, 0], sizes = [2, 128], strides = [1, 1]} : vector<16x128xf32> to vector<2x128xf32>
    %cst_44 = arith.constant dense<0.000000e+00> : vector<2x128xf32>
    %187 = tpu.matmul %184, %161, %cst_44 {dimension_numbers = #tpu.dot_dimension_numbers<[1], [0], [0], [1], [0, 0, 1, 1], [], []>} : vector<2x32xf32>, vector<32x128xf32>, vector<2x128xf32> -> vector<2x128xf32>
    %188 = arith.addf %186, %187 : vector<2x128xf32>
    %189 = math.tanh %188 : vector<2x128xf32>
    %190 = vector.broadcast %2 : vector<1x128xf32> to vector<2x128xf32>
    %191 = arith.mulf %189, %190 : vector<2x128xf32>
    %192 = vector.broadcast %5 : vector<1x128xf32> to vector<2x128xf32>
    %193 = arith.addf %191, %192 : vector<2x128xf32>
    %194 = vector.extract_strided_slice %193 {offsets = [0, 0], sizes = [2, 32], strides = [1, 1]} : vector<2x128xf32> to vector<2x32xf32>
    %195 = vector.extract_strided_slice %193 {offsets = [0, 32], sizes = [2, 32], strides = [1, 1]} : vector<2x128xf32> to vector<2x32xf32>
    %196 = vector.extract_strided_slice %193 {offsets = [0, 64], sizes = [2, 32], strides = [1, 1]} : vector<2x128xf32> to vector<2x32xf32>
    %197 = vector.extract_strided_slice %193 {offsets = [0, 96], sizes = [2, 32], strides = [1, 1]} : vector<2x128xf32> to vector<2x32xf32>
    %198 = arith.mulf %195, %182 : vector<2x32xf32>
    %199 = arith.mulf %194, %197 : vector<2x32xf32>
    %200 = arith.addf %198, %199 : vector<2x32xf32>
    %201 = math.tanh %200 : vector<2x32xf32>
    %202 = arith.mulf %196, %201 : vector<2x32xf32>
    %c2_45 = arith.constant 2 : index
    %c0_46 = arith.constant 0 : index
    %203 = vector.load %arg10[%c2_45, %c0_46] : memref<16x32xf32, #tpu.memory_space<vmem>>, vector<2x32xf32>
    tpu.vector_store %arg10[%c2_45, %c0_46], %202 {strides = array<i32>} : memref<16x32xf32, #tpu.memory_space<vmem>>, vector<2x32xf32>,
    %204 = vector.extract_strided_slice %165 {offsets = [4, 0], sizes = [2, 128], strides = [1, 1]} : vector<16x128xf32> to vector<2x128xf32>
    %cst_47 = arith.constant dense<0.000000e+00> : vector<2x128xf32>
    %205 = tpu.matmul %202, %161, %cst_47 {dimension_numbers = #tpu.dot_dimension_numbers<[1], [0], [0], [1], [0, 0, 1, 1], [], []>} : vector<2x32xf32>, vector<32x128xf32>, vector<2x128xf32> -> vector<2x128xf32>
    %206 = arith.addf %204, %205 : vector<2x128xf32>
    %207 = math.tanh %206 : vector<2x128xf32>
    %208 = vector.broadcast %2 : vector<1x128xf32> to vector<2x128xf32>
    %209 = arith.mulf %207, %208 : vector<2x128xf32>
    %210 = vector.broadcast %5 : vector<1x128xf32> to vector<2x128xf32>
    %211 = arith.addf %209, %210 : vector<2x128xf32>
    %212 = vector.extract_strided_slice %211 {offsets = [0, 0], sizes = [2, 32], strides = [1, 1]} : vector<2x128xf32> to vector<2x32xf32>
    %213 = vector.extract_strided_slice %211 {offsets = [0, 32], sizes = [2, 32], strides = [1, 1]} : vector<2x128xf32> to vector<2x32xf32>
    %214 = vector.extract_strided_slice %211 {offsets = [0, 64], sizes = [2, 32], strides = [1, 1]} : vector<2x128xf32> to vector<2x32xf32>
    %215 = vector.extract_strided_slice %211 {offsets = [0, 96], sizes = [2, 32], strides = [1, 1]} : vector<2x128xf32> to vector<2x32xf32>
    %216 = arith.mulf %213, %200 : vector<2x32xf32>
    %217 = arith.mulf %212, %215 : vector<2x32xf32>
    %218 = arith.addf %216, %217 : vector<2x32xf32>
    %219 = math.tanh %218 : vector<2x32xf32>
    %220 = arith.mulf %214, %219 : vector<2x32xf32>
    %c4_48 = arith.constant 4 : index
    %c0_49 = arith.constant 0 : index
    %221 = vector.load %arg10[%c4_48, %c0_49] : memref<16x32xf32, #tpu.memory_space<vmem>>, vector<2x32xf32>
    tpu.vector_store %arg10[%c4_48, %c0_49], %220 {strides = array<i32>} : memref<16x32xf32, #tpu.memory_space<vmem>>, vector<2x32xf32>,
    %222 = vector.extract_strided_slice %165 {offsets = [6, 0], sizes = [2, 128], strides = [1, 1]} : vector<16x128xf32> to vector<2x128xf32>
    %cst_50 = arith.constant dense<0.000000e+00> : vector<2x128xf32>
    %223 = tpu.matmul %220, %161, %cst_50 {dimension_numbers = #tpu.dot_dimension_numbers<[1], [0], [0], [1], [0, 0, 1, 1], [], []>} : vector<2x32xf32>, vector<32x128xf32>, vector<2x128xf32> -> vector<2x128xf32>
    %224 = arith.addf %222, %223 : vector<2x128xf32>
    %225 = math.tanh %224 : vector<2x128xf32>
    %226 = vector.broadcast %2 : vector<1x128xf32> to vector<2x128xf32>
    %227 = arith.mulf %225, %226 : vector<2x128xf32>
    %228 = vector.broadcast %5 : vector<1x128xf32> to vector<2x128xf32>
    %229 = arith.addf %227, %228 : vector<2x128xf32>
    %230 = vector.extract_strided_slice %229 {offsets = [0, 0], sizes = [2, 32], strides = [1, 1]} : vector<2x128xf32> to vector<2x32xf32>
    %231 = vector.extract_strided_slice %229 {offsets = [0, 32], sizes = [2, 32], strides = [1, 1]} : vector<2x128xf32> to vector<2x32xf32>
    %232 = vector.extract_strided_slice %229 {offsets = [0, 64], sizes = [2, 32], strides = [1, 1]} : vector<2x128xf32> to vector<2x32xf32>
    %233 = vector.extract_strided_slice %229 {offsets = [0, 96], sizes = [2, 32], strides = [1, 1]} : vector<2x128xf32> to vector<2x32xf32>
    %234 = arith.mulf %231, %218 : vector<2x32xf32>
    %235 = arith.mulf %230, %233 : vector<2x32xf32>
    %236 = arith.addf %234, %235 : vector<2x32xf32>
    %237 = math.tanh %236 : vector<2x32xf32>
    %238 = arith.mulf %232, %237 : vector<2x32xf32>
    %c6_51 = arith.constant 6 : index
    %c0_52 = arith.constant 0 : index
    %239 = vector.load %arg10[%c6_51, %c0_52] : memref<16x32xf32, #tpu.memory_space<vmem>>, vector<2x32xf32>
    tpu.vector_store %arg10[%c6_51, %c0_52], %238 {strides = array<i32>} : memref<16x32xf32, #tpu.memory_space<vmem>>, vector<2x32xf32>,
    %240 = vector.extract_strided_slice %165 {offsets = [8, 0], sizes = [2, 128], strides = [1, 1]} : vector<16x128xf32> to vector<2x128xf32>
    %cst_53 = arith.constant dense<0.000000e+00> : vector<2x128xf32>
    %241 = tpu.matmul %238, %161, %cst_53 {dimension_numbers = #tpu.dot_dimension_numbers<[1], [0], [0], [1], [0, 0, 1, 1], [], []>} : vector<2x32xf32>, vector<32x128xf32>, vector<2x128xf32> -> vector<2x128xf32>
    %242 = arith.addf %240, %241 : vector<2x128xf32>
    %243 = math.tanh %242 : vector<2x128xf32>
    %244 = vector.broadcast %2 : vector<1x128xf32> to vector<2x128xf32>
    %245 = arith.mulf %243, %244 : vector<2x128xf32>
    %246 = vector.broadcast %5 : vector<1x128xf32> to vector<2x128xf32>
    %247 = arith.addf %245, %246 : vector<2x128xf32>
    %248 = vector.extract_strided_slice %247 {offsets = [0, 0], sizes = [2, 32], strides = [1, 1]} : vector<2x128xf32> to vector<2x32xf32>
    %249 = vector.extract_strided_slice %247 {offsets = [0, 32], sizes = [2, 32], strides = [1, 1]} : vector<2x128xf32> to vector<2x32xf32>
    %250 = vector.extract_strided_slice %247 {offsets = [0, 64], sizes = [2, 32], strides = [1, 1]} : vector<2x128xf32> to vector<2x32xf32>
    %251 = vector.extract_strided_slice %247 {offsets = [0, 96], sizes = [2, 32], strides = [1, 1]} : vector<2x128xf32> to vector<2x32xf32>
    %252 = arith.mulf %249, %236 : vector<2x32xf32>
    %253 = arith.mulf %248, %251 : vector<2x32xf32>
    %254 = arith.addf %252, %253 : vector<2x32xf32>
    %255 = math.tanh %254 : vector<2x32xf32>
    %256 = arith.mulf %250, %255 : vector<2x32xf32>
    %c8_54 = arith.constant 8 : index
    %c0_55 = arith.constant 0 : index
    %257 = vector.load %arg10[%c8_54, %c0_55] : memref<16x32xf32, #tpu.memory_space<vmem>>, vector<2x32xf32>
    tpu.vector_store %arg10[%c8_54, %c0_55], %256 {strides = array<i32>} : memref<16x32xf32, #tpu.memory_space<vmem>>, vector<2x32xf32>,
    %258 = vector.extract_strided_slice %165 {offsets = [10, 0], sizes = [2, 128], strides = [1, 1]} : vector<16x128xf32> to vector<2x128xf32>
    %cst_56 = arith.constant dense<0.000000e+00> : vector<2x128xf32>
    %259 = tpu.matmul %256, %161, %cst_56 {dimension_numbers = #tpu.dot_dimension_numbers<[1], [0], [0], [1], [0, 0, 1, 1], [], []>} : vector<2x32xf32>, vector<32x128xf32>, vector<2x128xf32> -> vector<2x128xf32>
    %260 = arith.addf %258, %259 : vector<2x128xf32>
    %261 = math.tanh %260 : vector<2x128xf32>
    %262 = vector.broadcast %2 : vector<1x128xf32> to vector<2x128xf32>
    %263 = arith.mulf %261, %262 : vector<2x128xf32>
    %264 = vector.broadcast %5 : vector<1x128xf32> to vector<2x128xf32>
    %265 = arith.addf %263, %264 : vector<2x128xf32>
    %266 = vector.extract_strided_slice %265 {offsets = [0, 0], sizes = [2, 32], strides = [1, 1]} : vector<2x128xf32> to vector<2x32xf32>
    %267 = vector.extract_strided_slice %265 {offsets = [0, 32], sizes = [2, 32], strides = [1, 1]} : vector<2x128xf32> to vector<2x32xf32>
    %268 = vector.extract_strided_slice %265 {offsets = [0, 64], sizes = [2, 32], strides = [1, 1]} : vector<2x128xf32> to vector<2x32xf32>
    %269 = vector.extract_strided_slice %265 {offsets = [0, 96], sizes = [2, 32], strides = [1, 1]} : vector<2x128xf32> to vector<2x32xf32>
    %270 = arith.mulf %267, %254 : vector<2x32xf32>
    %271 = arith.mulf %266, %269 : vector<2x32xf32>
    %272 = arith.addf %270, %271 : vector<2x32xf32>
    %273 = math.tanh %272 : vector<2x32xf32>
    %274 = arith.mulf %268, %273 : vector<2x32xf32>
    %c10_57 = arith.constant 10 : index
    %c0_58 = arith.constant 0 : index
    %275 = vector.load %arg10[%c10_57, %c0_58] : memref<16x32xf32, #tpu.memory_space<vmem>>, vector<2x32xf32>
    tpu.vector_store %arg10[%c10_57, %c0_58], %274 {strides = array<i32>} : memref<16x32xf32, #tpu.memory_space<vmem>>, vector<2x32xf32>,
    %276 = vector.extract_strided_slice %165 {offsets = [12, 0], sizes = [2, 128], strides = [1, 1]} : vector<16x128xf32> to vector<2x128xf32>
    %cst_59 = arith.constant dense<0.000000e+00> : vector<2x128xf32>
    %277 = tpu.matmul %274, %161, %cst_59 {dimension_numbers = #tpu.dot_dimension_numbers<[1], [0], [0], [1], [0, 0, 1, 1], [], []>} : vector<2x32xf32>, vector<32x128xf32>, vector<2x128xf32> -> vector<2x128xf32>
    %278 = arith.addf %276, %277 : vector<2x128xf32>
    %279 = math.tanh %278 : vector<2x128xf32>
    %280 = vector.broadcast %2 : vector<1x128xf32> to vector<2x128xf32>
    %281 = arith.mulf %279, %280 : vector<2x128xf32>
    %282 = vector.broadcast %5 : vector<1x128xf32> to vector<2x128xf32>
    %283 = arith.addf %281, %282 : vector<2x128xf32>
    %284 = vector.extract_strided_slice %283 {offsets = [0, 0], sizes = [2, 32], strides = [1, 1]} : vector<2x128xf32> to vector<2x32xf32>
    %285 = vector.extract_strided_slice %283 {offsets = [0, 32], sizes = [2, 32], strides = [1, 1]} : vector<2x128xf32> to vector<2x32xf32>
    %286 = vector.extract_strided_slice %283 {offsets = [0, 64], sizes = [2, 32], strides = [1, 1]} : vector<2x128xf32> to vector<2x32xf32>
    %287 = vector.extract_strided_slice %283 {offsets = [0, 96], sizes = [2, 32], strides = [1, 1]} : vector<2x128xf32> to vector<2x32xf32>
    %288 = arith.mulf %285, %272 : vector<2x32xf32>
    %289 = arith.mulf %284, %287 : vector<2x32xf32>
    %290 = arith.addf %288, %289 : vector<2x32xf32>
    %291 = math.tanh %290 : vector<2x32xf32>
    %292 = arith.mulf %286, %291 : vector<2x32xf32>
    %c12_60 = arith.constant 12 : index
    %c0_61 = arith.constant 0 : index
    %293 = vector.load %arg10[%c12_60, %c0_61] : memref<16x32xf32, #tpu.memory_space<vmem>>, vector<2x32xf32>
    tpu.vector_store %arg10[%c12_60, %c0_61], %292 {strides = array<i32>} : memref<16x32xf32, #tpu.memory_space<vmem>>, vector<2x32xf32>,
    %294 = vector.extract_strided_slice %165 {offsets = [14, 0], sizes = [2, 128], strides = [1, 1]} : vector<16x128xf32> to vector<2x128xf32>
    %cst_62 = arith.constant dense<0.000000e+00> : vector<2x128xf32>
    %295 = tpu.matmul %292, %161, %cst_62 {dimension_numbers = #tpu.dot_dimension_numbers<[1], [0], [0], [1], [0, 0, 1, 1], [], []>} : vector<2x32xf32>, vector<32x128xf32>, vector<2x128xf32> -> vector<2x128xf32>
    %296 = arith.addf %294, %295 : vector<2x128xf32>
    %297 = math.tanh %296 : vector<2x128xf32>
    %298 = vector.broadcast %2 : vector<1x128xf32> to vector<2x128xf32>
    %299 = arith.mulf %297, %298 : vector<2x128xf32>
    %300 = vector.broadcast %5 : vector<1x128xf32> to vector<2x128xf32>
    %301 = arith.addf %299, %300 : vector<2x128xf32>
    %302 = vector.extract_strided_slice %301 {offsets = [0, 0], sizes = [2, 32], strides = [1, 1]} : vector<2x128xf32> to vector<2x32xf32>
    %303 = vector.extract_strided_slice %301 {offsets = [0, 32], sizes = [2, 32], strides = [1, 1]} : vector<2x128xf32> to vector<2x32xf32>
    %304 = vector.extract_strided_slice %301 {offsets = [0, 64], sizes = [2, 32], strides = [1, 1]} : vector<2x128xf32> to vector<2x32xf32>
    %305 = vector.extract_strided_slice %301 {offsets = [0, 96], sizes = [2, 32], strides = [1, 1]} : vector<2x128xf32> to vector<2x32xf32>
    %306 = arith.mulf %303, %290 : vector<2x32xf32>
    %307 = arith.mulf %302, %305 : vector<2x32xf32>
    %308 = arith.addf %306, %307 : vector<2x32xf32>
    %309 = math.tanh %308 : vector<2x32xf32>
    %310 = arith.mulf %304, %309 : vector<2x32xf32>
    %c14_63 = arith.constant 14 : index
    %c0_64 = arith.constant 0 : index
    %311 = vector.load %arg10[%c14_63, %c0_64] : memref<16x32xf32, #tpu.memory_space<vmem>>, vector<2x32xf32>
    tpu.vector_store %arg10[%c14_63, %c0_64], %310 {strides = array<i32>} : memref<16x32xf32, #tpu.memory_space<vmem>>, vector<2x32xf32>,
    %c0_65 = arith.constant 0 : index
    %c0_66 = arith.constant 0 : index
    %312 = vector.load %arg10[%c0_65, %c0_66] : memref<16x32xf32, #tpu.memory_space<vmem>>, vector<16x32xf32>
    %c0_67 = arith.constant 0 : index
    %c0_68 = arith.constant 0 : index
    %313 = vector.load %arg7[%c0_67, %c0_68] : memref<32x128xf32, #tpu.memory_space<vmem>>, vector<32x128xf32>
    %cst_69 = arith.constant dense<0.000000e+00> : vector<16x128xf32>
    %314 = tpu.matmul %312, %313, %cst_69 {dimension_numbers = #tpu.dot_dimension_numbers<[1], [0], [0], [1], [0, 0, 1, 1], [], []>} : vector<16x32xf32>, vector<32x128xf32>, vector<16x128xf32> -> vector<16x128xf32>
    %c0_70 = arith.constant 0 : index
    %c0_71 = arith.constant 0 : index
    %315 = vector.load %arg8[%c0_70, %c0_71] : memref<1x128xf32, #tpu.memory_space<vmem>>, vector<1x128xf32>
    %316 = vector.broadcast %315 : vector<1x128xf32> to vector<16x128xf32>
    %317 = arith.addf %314, %316 : vector<16x128xf32>
    %c0_72 = arith.constant 0 : index
    %c0_73 = arith.constant 0 : index
    %318 = vector.load %arg9[%c0_72, %c0_73] : memref<16x128xf32, #tpu.memory_space<vmem>>, vector<16x128xf32>
    tpu.vector_store %arg9[%c0_72, %c0_73], %317 {strides = array<i32>} : memref<16x128xf32, #tpu.memory_space<vmem>>, vector<16x128xf32>,
    return
  }
}

</mosaic_0001>

<llo_original>
// kernel: tpu_custom_call.1
$region0: #{tpu_custom_call.1}
  #allocation0 [shape = 'u32[]', space=smem, size = 0x4, offset = 0x4, fixed_abs, tag = 'smem constant byte address 0x4 - core index']
  #allocation1 [shape = 'u32[72,128]{1,0:T(1,128)}', space=vmem, size = 0x9000, scoped, tag = 'internal scratch']
  #allocation2 [shape = 'f32[16,32]{1,0:T(8,128)}', space=vmem, size = 0x2000, scoped, tag = 'scratch operand']
  %s0 = inlined_call_operand.hbm [shape: f32[16,16], index: 0, kind: input, shape index: {}]
  %s1 = inlined_call_operand.hbm [shape: f32[16,128], index: 1, kind: input, shape index: {}]
  %s2 = inlined_call_operand.hbm [shape: f32[32,128], index: 2, kind: input, shape index: {}]
  %s3 = inlined_call_operand.vmem [shape: f32[1,128], index: 3, kind: input, shape index: {}]
  %s4 = inlined_call_operand.hbm [shape: f32[32,128], index: 4, kind: input, shape index: {}]
  %s5 = inlined_call_operand.hbm [shape: f32[32,128], index: 5, kind: input, shape index: {}]
  %s6 = inlined_call_operand.vmem [shape: f32[1,128], index: 6, kind: input, shape index: {}]
  %s7 = inlined_call_operand.hbm [shape: f32[32,128], index: 7, kind: input, shape index: {}]
  %s8 = inlined_call_operand.vmem [shape: f32[1,128], index: 8, kind: input, shape index: {}]
  %s9 = inlined_call_operand.hbm [shape: f32[16,128], index: 9, kind: output, shape index: {}]
  %s10 = sld [smem:[#allocation0]]
  $region70: #{tpu_custom_call.1} parent=0
    _
  %s12 = ssub.s32 1, %s10
  %s13 = scalar_select 0, %s12, %s10
  $region1: #{tpu_custom_call.1} parent=0
    #allocation3 [shape = 'u8[8192]{0}', space=vmem, size = 0x2000, scoped, tag = 'input window, operand 0, single buffered']
    #allocation4 [shape = 's32[1]{0}', space=sflag, size = 0x4, scoped, tag = 'scoped memory for tpu_custom_call.1']
    #allocation5 [shape = 's32[1]{0}', space=sflag, size = 0x4, scoped, tag = 'scoped memory for tpu_custom_call.1']
    #allocation6 [shape = 'u8[8192]{0}', space=vmem, size = 0x2000, scoped, tag = 'input window, operand 1, single buffered']
    #allocation7 [shape = 's32[1]{0}', space=sflag, size = 0x4, scoped, tag = 'scoped memory for tpu_custom_call.1']
    #allocation8 [shape = 'u8[16384]{0}', space=vmem, size = 0x4000, scoped, tag = 'input window, operand 2, single buffered']
    #allocation9 [shape = 'u8[16384]{0}', space=vmem, size = 0x4000, scoped, tag = 'input window, operand 4, single buffered']
    #allocation10 [shape = 's32[1]{0}', space=sflag, size = 0x4, scoped, tag = 'scoped memory for tpu_custom_call.1']
    #allocation11 [shape = 'u8[16384]{0}', space=vmem, size = 0x4000, scoped, tag = 'input window, operand 5, single buffered']
    #allocation12 [shape = 'u8[16384]{0}', space=vmem, size = 0x4000, scoped, tag = 'input window, operand 7, single buffered']
    #allocation13 [shape = 's32[1]{0}', space=sflag, size = 0x4, scoped, tag = 'scoped memory for tpu_custom_call.1']
    #allocation14 [shape = 'u8[8192]{0}', space=vmem, size = 0x2000, scoped, tag = 'output window, operand 0, single buffered']
    %14 = vsyncpa [#allocation4], 0
    %15 = vsyncpa [#allocation7], 0
    %16 = vsyncpa [#allocation10], 0
    %17 = vsyncpa [#allocation13], 0
    %18 = vsyncpa [#allocation5], 0
    // Predicated region
    $region2: #{tpu_custom_call.1} parent=1 // pred_check
      _
    $region3: #{tpu_custom_call.1} parent=1 // pred_check_branch
      %20 = sbr.rel (0) target = $region5
    $region4: #{tpu_custom_call.1} parent=1 // pred_region
      %22 = vsyncadd [#allocation4], 0
      %s23 = sshll.u32 %s0, 4
      %s24 = int_to_ptr.hbm [resolvable:$true] %s23
      %s25 = sshll.u32 [#allocation3], 4
      %s26 = int_to_ptr.vmem [resolvable:$true] %s25
      %31 = dma.hbm_to_vmem [thread:$0]  %s24, 256, %s26, [#allocation4], 128, 128, 8
    $region5: #{tpu_custom_call.1} parent=1 // pred_fallthru
      _
    // Predicated region
    $region6: #{tpu_custom_call.1} parent=1 // pred_check
      _
    $region7: #{tpu_custom_call.1} parent=1 // pred_check_branch
      %33 = sbr.rel (0) target = $region9
    $region8: #{tpu_custom_call.1} parent=1 // pred_region
      %35 = vsyncadd [#allocation7], 0
      %s36 = sshll.u32 %s1, 4
      %s37 = int_to_ptr.hbm [resolvable:$true] %s36
      %s38 = sshll.u32 [#allocation6], 4
      %s39 = int_to_ptr.vmem [resolvable:$true] %s38
      %44 = dma.hbm_to_vmem [thread:$0]  %s37, 256, %s39, [#allocation7], 128, 128, 8
    $region9: #{tpu_custom_call.1} parent=1 // pred_fallthru
      _
    // Predicated region
    $region10: #{tpu_custom_call.1} parent=1 // pred_check
      _
    $region11: #{tpu_custom_call.1} parent=1 // pred_check_branch
      %46 = sbr.rel (0) target = $region13
    $region12: #{tpu_custom_call.1} parent=1 // pred_region
      %48 = vsyncadd [#allocation7], 0
      %s49 = sshll.u32 %s2, 4
      %s50 = int_to_ptr.hbm [resolvable:$true] %s49
      %s51 = sshll.u32 [#allocation8], 4
      %s52 = int_to_ptr.vmem [resolvable:$true] %s51
      %57 = dma.hbm_to_vmem [thread:$0]  %s50, 512, %s52, [#allocation7], 128, 128, 8
    $region13: #{tpu_custom_call.1} parent=1 // pred_fallthru
      _
    // Predicated region
    $region14: #{tpu_custom_call.1} parent=1 // pred_check
      _
    $region15: #{tpu_custom_call.1} parent=1 // pred_check_branch
      %59 = sbr.rel (0) target = $region17
    $region16: #{tpu_custom_call.1} parent=1 // pred_region
      _
    $region17: #{tpu_custom_call.1} parent=1 // pred_fallthru
      _
    // Predicated region
    $region18: #{tpu_custom_call.1} parent=1 // pred_check
      _
    $region19: #{tpu_custom_call.1} parent=1 // pred_check_branch
      %61 = sbr.rel (0) target = $region21
    $region20: #{tpu_custom_call.1} parent=1 // pred_region
      %63 = vsyncadd [#allocation10], 0
      %s64 = sshll.u32 %s4, 4
      %s65 = int_to_ptr.hbm [resolvable:$true] %s64
      %s66 = sshll.u32 [#allocation9], 4
      %s67 = int_to_ptr.vmem [resolvable:$true] %s66
      %72 = dma.hbm_to_vmem [thread:$0]  %s65, 512, %s67, [#allocation10], 128, 128, 8
    $region21: #{tpu_custom_call.1} parent=1 // pred_fallthru
      _
    // Predicated region
    $region22: #{tpu_custom_call.1} parent=1 // pred_check
      _
    $region23: #{tpu_custom_call.1} parent=1 // pred_check_branch
      %74 = sbr.rel (0) target = $region25
    $region24: #{tpu_custom_call.1} parent=1 // pred_region
      %76 = vsyncadd [#allocation10], 0
      %s77 = sshll.u32 %s5, 4
      %s78 = int_to_ptr.hbm [resolvable:$true] %s77
      %s79 = sshll.u32 [#allocation11], 4
      %s80 = int_to_ptr.vmem [resolvable:$true] %s79
      %85 = dma.hbm_to_vmem [thread:$0]  %s78, 512, %s80, [#allocation10], 128, 128, 8
    $region25: #{tpu_custom_call.1} parent=1 // pred_fallthru
      _
    // Predicated region
    $region26: #{tpu_custom_call.1} parent=1 // pred_check
      _
    $region27: #{tpu_custom_call.1} parent=1 // pred_check_branch
      %87 = sbr.rel (0) target = $region29
    $region28: #{tpu_custom_call.1} parent=1 // pred_region
      _
    $region29: #{tpu_custom_call.1} parent=1 // pred_fallthru
      _
    // Predicated region
    $region30: #{tpu_custom_call.1} parent=1 // pred_check
      _
    $region31: #{tpu_custom_call.1} parent=1 // pred_check_branch
      %89 = sbr.rel (0) target = $region33
    $region32: #{tpu_custom_call.1} parent=1 // pred_region
      %91 = vsyncadd [#allocation13], 0
      %s92 = sshll.u32 %s7, 4
      %s93 = int_to_ptr.hbm [resolvable:$true] %s92
      %s94 = sshll.u32 [#allocation12], 4
      %s95 = int_to_ptr.vmem [resolvable:$true] %s94
      %100 = dma.hbm_to_vmem [thread:$0]  %s93, 512, %s95, [#allocation13], 128, 128, 8
    $region33: #{tpu_custom_call.1} parent=1 // pred_fallthru
      _
    // Predicated region
    $region34: #{tpu_custom_call.1} parent=1 // pred_check
      _
    $region35: #{tpu_custom_call.1} parent=1 // pred_check_branch
      %102 = sbr.rel (0) target = $region37
    $region36: #{tpu_custom_call.1} parent=1 // pred_region
      _
    $region37: #{tpu_custom_call.1} parent=1 // pred_fallthru
      _
    // Predicated region
    $region38: #{tpu_custom_call.1} parent=1 // pred_check
      _
    $region39: #{tpu_custom_call.1} parent=1 // pred_check_branch
      %104 = sbr.rel (0) target = $region41
    $region40: #{tpu_custom_call.1} parent=1 // pred_region
      %106 = dma.done [#allocation4], 256
    $region41: #{tpu_custom_call.1} parent=1 // pred_fallthru
      _
    // Predicated region
    $region42: #{tpu_custom_call.1} parent=1 // pred_check
      _
    $region43: #{tpu_custom_call.1} parent=1 // pred_check_branch
      %108 = sbr.rel (0) target = $region45
    $region44: #{tpu_custom_call.1} parent=1 // pred_region
      %110 = dma.done [#allocation7], 256
    $region45: #{tpu_custom_call.1} parent=1 // pred_fallthru
      _
    // Predicated region
    $region46: #{tpu_custom_call.1} parent=1 // pred_check
      _
    $region47: #{tpu_custom_call.1} parent=1 // pred_check_branch
      %112 = sbr.rel (0) target = $region49
    $region48: #{tpu_custom_call.1} parent=1 // pred_region
      %114 = dma.done [#allocation7], 512
    $region49: #{tpu_custom_call.1} parent=1 // pred_fallthru
      _
    // Predicated region
    $region50: #{tpu_custom_call.1} parent=1 // pred_check
      _
    $region51: #{tpu_custom_call.1} parent=1 // pred_check_branch
      %116 = sbr.rel (0) target = $region53
    $region52: #{tpu_custom_call.1} parent=1 // pred_region
      %118 = dma.done [#allocation10], 512
    $region53: #{tpu_custom_call.1} parent=1 // pred_fallthru
      _
    // Predicated region
    $region54: #{tpu_custom_call.1} parent=1 // pred_check
      _
    $region55: #{tpu_custom_call.1} parent=1 // pred_check_branch
      %120 = sbr.rel (0) target = $region57
    $region56: #{tpu_custom_call.1} parent=1 // pred_region
      %122 = dma.done [#allocation10], 512
    $region57: #{tpu_custom_call.1} parent=1 // pred_fallthru
      _
    // Predicated region
    $region58: #{tpu_custom_call.1} parent=1 // pred_check
      _
    $region59: #{tpu_custom_call.1} parent=1 // pred_check_branch
      %124 = sbr.rel (0) target = $region61
    $region60: #{tpu_custom_call.1} parent=1 // pred_region
      %126 = dma.done [#allocation13], 512
    $region61: #{tpu_custom_call.1} parent=1 // pred_fallthru
      _
    %vm127 = vcmask 785408
    %v128 = vsel %vm127, 0.5, 1.0
    %v129 = vsel %vm127, 0.5, 0.0
    %v130 = vld [vmem:[#allocation3] sm:$0xff]
    %v131 = vld [vmem:[#allocation3 + $0x8] sm:$0xff]
    %v132 = vld [vmem:[#allocation6] sm:$0xff]
    %v133 = vld [vmem:[#allocation6 + $0x8] sm:$0xff]
    %v134 = vld [vmem:[#allocation8] sm:$0xff]
    %v135 = vld [vmem:[#allocation8 + $0x8] sm:$0xff]
    %v136 = vld [vmem:[#allocation8 + $0x10] sm:$0xff]
    %v137 = vld [vmem:[#allocation8 + $0x18] sm:$0xff]
    %v138 = vld [vmem:[%s3] sm:$0x1]
    %v140 = vperm.slane %v138, 0
    %vm142 = vcmask 130048
    %v144 = vsel %vm142, %v130, 0
    %v147 = vsel %vm142, %v131, 0
    %149 = vmatpush.msra.mxu0 0.0
    %150 = vmatpush.msra.mxu0 0.0
    %151 = vmatpush.msra.mxu0 0.0
    %152 = vmatpush.msra.mxu0 0.0
    %153 = vmatpush.msra.mxu0 0.0
    %154 = vmatpush.msra.mxu0 0.0
    %155 = vmatpush.msra.mxu0 0.0
    %156 = vmatpush.msra.mxu0 0.0
    %157 = vmatpush.msra.mxu0 0.0
    %158 = vmatpush.msra.mxu0 0.0
    %159 = vmatpush.msra.mxu0 0.0
    %160 = vmatpush.msra.mxu0 0.0
    %161 = vmatpush.msra.mxu0 0.0
    %162 = vmatpush.msra.mxu0 0.0
    %163 = vmatpush.msra.mxu0 %v133
    %164 = vmatpush.msra.mxu0 %v132
    %165 = vmatmul.f32.gmra.mxu0 %v144
    %v166 = vpop.f32.mrf.mxu0
    %v167 = vadd.f32 %v140, %v166
    %168 = vmatmul.f32.gmra.mxu0 %v147
    %v169 = vpop.f32.mrf.mxu0
    %v170 = vadd.f32 %v140, %v169
    %171 = vdwg.mxu0
    %vm172 = vcmask 261120
    %v174 = vsel %vm172, 0.0, 0
    %176 = vmatpush.msra.mxu0 0.0
    %177 = vmatpush.msra.mxu0 0.0
    %178 = vmatpush.msra.mxu0 0.0
    %179 = vmatpush.msra.mxu0 0.0
    %180 = vmatpush.msra.mxu0 0.0
    %181 = vmatpush.msra.mxu0 0.0
    %182 = vmatpush.msra.mxu0 0.0
    %183 = vmatpush.msra.mxu0 0.0
    %184 = vmatpush.msra.mxu0 0.0
    %185 = vmatpush.msra.mxu0 0.0
    %186 = vmatpush.msra.mxu0 0.0
    %187 = vmatpush.msra.mxu0 0.0
    %188 = vmatpush.msra.mxu0 %v137
    %189 = vmatpush.msra.mxu0 %v136
    %190 = vmatpush.msra.mxu0 %v135
    %191 = vmatpush.msra.mxu0 %v134
    %192 = vmatmul.f32.gmra.mxu0 %v174
    %v193 = vpop.f32.mrf.mxu0
    %v194 = vadd.f32 0.0, %v193
    %195 = vdwg.mxu0
    %v196 = vadd.f32 %v167, %v194
    %v197 = vtanh.pop %v196
    %v198 = vperm.slane %v128, 0
    %v199 = vmul.f32 %v197, %v198
    %v200 = vperm.slane %v129, 0
    %v201 = vadd.f32 %v199, %v200
    %v202 = vmul.f32 %v201, 0.0
    %204 = vrot.lane.b32.xlu0 %v201, 32
    %v205 = vpop.permute.xlu0 %204
    %v207 = vmul.f32 %v201, %v205
    %209 = vrot.lane.b32.xlu0 %v207, 32
    %v210 = vpop.permute.xlu0 %209
    %v212 = vadd.f32 %v202, %v210
    %v213 = vtanh.pop %v212
    %215 = vrot.lane.b32.xlu0 %v213, 32
    %v216 = vpop.permute.xlu0 %215
    %v218 = vmul.f32 %v201, %v216
    %220 = vrot.lane.b32.xlu0 %v218, 64
    %v221 = vpop.permute.xlu0 %220
    %vm223 = vcmask 254976
    %224 = vst.msk [vmem:[#allocation2] sm:$0x3] %vm223, %v221
    %v225 = vsel %vm172, %v221, 0
    %227 = vmatpush.msra.mxu0 0.0
    %228 = vmatpush.msra.mxu0 0.0
    %229 = vmatpush.msra.mxu0 0.0
    %230 = vmatpush.msra.mxu0 0.0
    %231 = vmatpush.msra.mxu0 0.0
    %232 = vmatpush.msra.mxu0 0.0
    %233 = vmatpush.msra.mxu0 0.0
    %234 = vmatpush.msra.mxu0 0.0
    %235 = vmatpush.msra.mxu0 0.0
    %236 = vmatpush.msra.mxu0 0.0
    %237 = vmatpush.msra.mxu0 0.0
    %238 = vmatpush.msra.mxu0 0.0
    %239 = vmatpush.msra.mxu0 %v137
    %240 = vmatpush.msra.mxu0 %v136
    %241 = vmatpush.msra.mxu0 %v135
    %242 = vmatpush.msra.mxu0 %v134
    %243 = vmatmul.f32.gmra.mxu0 %v225
    %v244 = vpop.f32.mrf.mxu0
    %v245 = vadd.f32 0.0, %v244
    %246 = vdwg.mxu0
    %v248 = vrot.slane %v245, 6
    %v250 = vadd.f32 %v167, %v248
    %v251 = vtanh.pop %v250
    %v252 = vmul.f32 %v251, %v198
    %v253 = vadd.f32 %v252, %v200
    %v255 = vrot.slane %v212, 6
    %v257 = vmul.f32 %v253, %v255
    %259 = vrot.lane.b32.xlu0 %v253, 32
    %v260 = vpop.permute.xlu0 %259
    %v262 = vmul.f32 %v253, %v260
    %264 = vrot.lane.b32.xlu0 %v262, 32
    %v265 = vpop.permute.xlu0 %264
    %v267 = vadd.f32 %v257, %v265
    %v268 = vtanh.pop %v267
    %270 = vrot.lane.b32.xlu0 %v268, 32
    %v271 = vpop.permute.xlu0 %270
    %v273 = vmul.f32 %v253, %v271
    %275 = vrot.lane.b32.xlu0 %v273, 64
    %v276 = vpop.permute.xlu0 %275
    %vm278 = vcmask 257026
    %279 = vst.msk [vmem:[#allocation2] sm:$0xc] %vm278, %v276
    %v280 = vrot.slane %v273, 2
    %281 = vrot.lane.b32.xlu0 %v280, 64
    %v282 = vpop.permute.xlu0 %281
    %v283 = vsel %vm172, %v282, 0
    %285 = vmatpush.msra.mxu0 0.0
    %286 = vmatpush.msra.mxu0 0.0
    %287 = vmatpush.msra.mxu0 0.0
    %288 = vmatpush.msra.mxu0 0.0
    %289 = vmatpush.msra.mxu0 0.0
    %290 = vmatpush.msra.mxu0 0.0
    %291 = vmatpush.msra.mxu0 0.0
    %292 = vmatpush.msra.mxu0 0.0
    %293 = vmatpush.msra.mxu0 0.0
    %294 = vmatpush.msra.mxu0 0.0
    %295 = vmatpush.msra.mxu0 0.0
    %296 = vmatpush.msra.mxu0 0.0
    %297 = vmatpush.msra.mxu0 %v137
    %298 = vmatpush.msra.mxu0 %v136
    %299 = vmatpush.msra.mxu0 %v135
    %300 = vmatpush.msra.mxu0 %v134
    %301 = vmatmul.f32.gmra.mxu0 %v283
    %v302 = vpop.f32.mrf.mxu0
    %v303 = vadd.f32 0.0, %v302
    %304 = vdwg.mxu0
    %v306 = vrot.slane %v303, 4
    %v308 = vadd.f32 %v167, %v306
    %v309 = vtanh.pop %v308
    %v310 = vmul.f32 %v309, %v198
    %v311 = vadd.f32 %v310, %v200
    %v313 = vrot.slane %v267, 6
    %v315 = vmul.f32 %v311, %v313
    %317 = vrot.lane.b32.xlu0 %v311, 32
    %v318 = vpop.permute.xlu0 %317
    %v320 = vmul.f32 %v311, %v318
    %322 = vrot.lane.b32.xlu0 %v320, 32
    %v323 = vpop.permute.xlu0 %322
    %v325 = vadd.f32 %v315, %v323
    %v326 = vtanh.pop %v325
    %328 = vrot.lane.b32.xlu0 %v326, 32
    %v329 = vpop.permute.xlu0 %328
    %v331 = vmul.f32 %v311, %v329
    %333 = vrot.lane.b32.xlu0 %v331, 64
    %v334 = vpop.permute.xlu0 %333
    %vm336 = vcmask 259076
    %337 = vst.msk [vmem:[#allocation2] sm:$0x30] %vm336, %v334
    %v338 = vrot.slane %v331, 4
    %339 = vrot.lane.b32.xlu0 %v338, 64
    %v340 = vpop.permute.xlu0 %339
    %v341 = vsel %vm172, %v340, 0
    %343 = vmatpush.msra.mxu0 0.0
    %344 = vmatpush.msra.mxu0 0.0
    %345 = vmatpush.msra.mxu0 0.0
    %346 = vmatpush.msra.mxu0 0.0
    %347 = vmatpush.msra.mxu0 0.0
    %348 = vmatpush.msra.mxu0 0.0
    %349 = vmatpush.msra.mxu0 0.0
    %350 = vmatpush.msra.mxu0 0.0
    %351 = vmatpush.msra.mxu0 0.0
    %352 = vmatpush.msra.mxu0 0.0
    %353 = vmatpush.msra.mxu0 0.0
    %354 = vmatpush.msra.mxu0 0.0
    %355 = vmatpush.msra.mxu0 %v137
    %356 = vmatpush.msra.mxu0 %v136
    %357 = vmatpush.msra.mxu0 %v135
    %358 = vmatpush.msra.mxu0 %v134
    %359 = vmatmul.f32.gmra.mxu0 %v341
    %v360 = vpop.f32.mrf.mxu0
    %v361 = vadd.f32 0.0, %v360
    %362 = vdwg.mxu0
    %v364 = vrot.slane %v361, 2
    %v366 = vadd.f32 %v167, %v364
    %v367 = vtanh.pop %v366
    %v368 = vmul.f32 %v367, %v198
    %v369 = vadd.f32 %v368, %v200
    %v371 = vrot.slane %v325, 6
    %v373 = vmul.f32 %v369, %v371
    %375 = vrot.lane.b32.xlu0 %v369, 32
    %v376 = vpop.permute.xlu0 %375
    %v378 = vmul.f32 %v369, %v376
    %380 = vrot.lane.b32.xlu0 %v378, 32
    %v381 = vpop.permute.xlu0 %380
    %v383 = vadd.f32 %v373, %v381
    %v384 = vtanh.pop %v383
    %386 = vrot.lane.b32.xlu0 %v384, 32
    %v387 = vpop.permute.xlu0 %386
    %v389 = vmul.f32 %v369, %v387
    %391 = vrot.lane.b32.xlu0 %v389, 64
    %v392 = vpop.permute.xlu0 %391
    %vm394 = vcmask 261126
    %395 = vst.msk [vmem:[#allocation2] sm:$0xc0] %vm394, %v392
    %v396 = vrot.slane %v389, 6
    %397 = vrot.lane.b32.xlu0 %v396, 64
    %v398 = vpop.permute.xlu0 %397
    %v399 = vsel %vm172, %v398, 0
    %401 = vmatpush.msra.mxu0 0.0
    %402 = vmatpush.msra.mxu0 0.0
    %403 = vmatpush.msra.mxu0 0.0
    %404 = vmatpush.msra.mxu0 0.0
    %405 = vmatpush.msra.mxu0 0.0
    %406 = vmatpush.msra.mxu0 0.0
    %407 = vmatpush.msra.mxu0 0.0
    %408 = vmatpush.msra.mxu0 0.0
    %409 = vmatpush.msra.mxu0 0.0
    %410 = vmatpush.msra.mxu0 0.0
    %411 = vmatpush.msra.mxu0 0.0
    %412 = vmatpush.msra.mxu0 0.0
    %413 = vmatpush.msra.mxu0 %v137
    %414 = vmatpush.msra.mxu0 %v136
    %415 = vmatpush.msra.mxu0 %v135
    %416 = vmatpush.msra.mxu0 %v134
    %417 = vmatmul.f32.gmra.mxu0 %v399
    %v418 = vpop.f32.mrf.mxu0
    %v419 = vadd.f32 0.0, %v418
    %420 = vdwg.mxu0
    %v421 = vadd.f32 %v170, %v419
    %v422 = vtanh.pop %v421
    %v423 = vmul.f32 %v422, %v198
    %v424 = vadd.f32 %v423, %v200
    %v426 = vrot.slane %v383, 6
    %v428 = vmul.f32 %v424, %v426
    %430 = vrot.lane.b32.xlu0 %v424, 32
    %v431 = vpop.permute.xlu0 %430
    %v433 = vmul.f32 %v424, %v431
    %435 = vrot.lane.b32.xlu0 %v433, 32
    %v436 = vpop.permute.xlu0 %435
    %v438 = vadd.f32 %v428, %v436
    %v439 = vtanh.pop %v438
    %441 = vrot.lane.b32.xlu0 %v439, 32
    %v442 = vpop.permute.xlu0 %441
    %v444 = vmul.f32 %v424, %v442
    %446 = vrot.lane.b32.xlu0 %v444, 64
    %v447 = vpop.permute.xlu0 %446
    %449 = vst.msk [vmem:[#allocation2 + $0x8] sm:$0x3] %vm223, %v447
    %v450 = vsel %vm172, %v447, 0
    %452 = vmatpush.msra.mxu0 0.0
    %453 = vmatpush.msra.mxu0 0.0
    %454 = vmatpush.msra.mxu0 0.0
    %455 = vmatpush.msra.mxu0 0.0
    %456 = vmatpush.msra.mxu0 0.0
    %457 = vmatpush.msra.mxu0 0.0
    %458 = vmatpush.msra.mxu0 0.0
    %459 = vmatpush.msra.mxu0 0.0
    %460 = vmatpush.msra.mxu0 0.0
    %461 = vmatpush.msra.mxu0 0.0
    %462 = vmatpush.msra.mxu0 0.0
    %463 = vmatpush.msra.mxu0 0.0
    %464 = vmatpush.msra.mxu0 %v137
    %465 = vmatpush.msra.mxu0 %v136
    %466 = vmatpush.msra.mxu0 %v135
    %467 = vmatpush.msra.mxu0 %v134
    %468 = vmatmul.f32.gmra.mxu0 %v450
    %v469 = vpop.f32.mrf.mxu0
    %v470 = vadd.f32 0.0, %v469
    %471 = vdwg.mxu0
    %v473 = vrot.slane %v470, 6
    %v475 = vadd.f32 %v170, %v473
    %v476 = vtanh.pop %v475
    %v477 = vmul.f32 %v476, %v198
    %v478 = vadd.f32 %v477, %v200
    %v480 = vrot.slane %v438, 6
    %v482 = vmul.f32 %v478, %v480
    %484 = vrot.lane.b32.xlu0 %v478, 32
    %v485 = vpop.permute.xlu0 %484
    %v487 = vmul.f32 %v478, %v485
    %489 = vrot.lane.b32.xlu0 %v487, 32
    %v490 = vpop.permute.xlu0 %489
    %v492 = vadd.f32 %v482, %v490
    %v493 = vtanh.pop %v492
    %495 = vrot.lane.b32.xlu0 %v493, 32
    %v496 = vpop.permute.xlu0 %495
    %v498 = vmul.f32 %v478, %v496
    %500 = vrot.lane.b32.xlu0 %v498, 64
    %v501 = vpop.permute.xlu0 %500
    %503 = vst.msk [vmem:[#allocation2 + $0x8] sm:$0xc] %vm278, %v501
    %v504 = vrot.slane %v498, 2
    %505 = vrot.lane.b32.xlu0 %v504, 64
    %v506 = vpop.permute.xlu0 %505
    %v507 = vsel %vm172, %v506, 0
    %509 = vmatpush.msra.mxu0 0.0
    %510 = vmatpush.msra.mxu0 0.0
    %511 = vmatpush.msra.mxu0 0.0
    %512 = vmatpush.msra.mxu0 0.0
    %513 = vmatpush.msra.mxu0 0.0
    %514 = vmatpush.msra.mxu0 0.0
    %515 = vmatpush.msra.mxu0 0.0
    %516 = vmatpush.msra.mxu0 0.0
    %517 = vmatpush.msra.mxu0 0.0
    %518 = vmatpush.msra.mxu0 0.0
    %519 = vmatpush.msra.mxu0 0.0
    %520 = vmatpush.msra.mxu0 0.0
    %521 = vmatpush.msra.mxu0 %v137
    %522 = vmatpush.msra.mxu0 %v136
    %523 = vmatpush.msra.mxu0 %v135
    %524 = vmatpush.msra.mxu0 %v134
    %525 = vmatmul.f32.gmra.mxu0 %v507
    %v526 = vpop.f32.mrf.mxu0
    %v527 = vadd.f32 0.0, %v526
    %528 = vdwg.mxu0
    %v530 = vrot.slane %v527, 4
    %v532 = vadd.f32 %v170, %v530
    %v533 = vtanh.pop %v532
    %v534 = vmul.f32 %v533, %v198
    %v535 = vadd.f32 %v534, %v200
    %v537 = vrot.slane %v492, 6
    %v539 = vmul.f32 %v535, %v537
    %541 = vrot.lane.b32.xlu0 %v535, 32
    %v542 = vpop.permute.xlu0 %541
    %v544 = vmul.f32 %v535, %v542
    %546 = vrot.lane.b32.xlu0 %v544, 32
    %v547 = vpop.permute.xlu0 %546
    %v549 = vadd.f32 %v539, %v547
    %v550 = vtanh.pop %v549
    %552 = vrot.lane.b32.xlu0 %v550, 32
    %v553 = vpop.permute.xlu0 %552
    %v555 = vmul.f32 %v535, %v553
    %557 = vrot.lane.b32.xlu0 %v555, 64
    %v558 = vpop.permute.xlu0 %557
    %560 = vst.msk [vmem:[#allocation2 + $0x8] sm:$0x30] %vm336, %v558
    %v561 = vrot.slane %v555, 4
    %562 = vrot.lane.b32.xlu0 %v561, 64
    %v563 = vpop.permute.xlu0 %562
    %v564 = vsel %vm172, %v563, 0
    %566 = vmatpush.msra.mxu0 0.0
    %567 = vmatpush.msra.mxu0 0.0
    %568 = vmatpush.msra.mxu0 0.0
    %569 = vmatpush.msra.mxu0 0.0
    %570 = vmatpush.msra.mxu0 0.0
    %571 = vmatpush.msra.mxu0 0.0
    %572 = vmatpush.msra.mxu0 0.0
    %573 = vmatpush.msra.mxu0 0.0
    %574 = vmatpush.msra.mxu0 0.0
    %575 = vmatpush.msra.mxu0 0.0
    %576 = vmatpush.msra.mxu0 0.0
    %577 = vmatpush.msra.mxu0 0.0
    %578 = vmatpush.msra.mxu0 %v137
    %579 = vmatpush.msra.mxu0 %v136
    %580 = vmatpush.msra.mxu0 %v135
    %581 = vmatpush.msra.mxu0 %v134
    %582 = vmatmul.f32.gmra.mxu0 %v564
    %v583 = vpop.f32.mrf.mxu0
    %v584 = vadd.f32 0.0, %v583
    %585 = vdwg.mxu0
    %v587 = vrot.slane %v584, 2
    %v589 = vadd.f32 %v170, %v587
    %v590 = vtanh.pop %v589
    %v591 = vmul.f32 %v590, %v198
    %v592 = vadd.f32 %v591, %v200
    %v594 = vrot.slane %v549, 6
    %v596 = vmul.f32 %v592, %v594
    %598 = vrot.lane.b32.xlu0 %v592, 32
    %v599 = vpop.permute.xlu0 %598
    %v601 = vmul.f32 %v592, %v599
    %603 = vrot.lane.b32.xlu0 %v601, 32
    %v604 = vpop.permute.xlu0 %603
    %v606 = vadd.f32 %v596, %v604
    %v607 = vtanh.pop %v606
    %609 = vrot.lane.b32.xlu0 %v607, 32
    %v610 = vpop.permute.xlu0 %609
    %v612 = vmul.f32 %v592, %v610
    %614 = vrot.lane.b32.xlu0 %v612, 64
    %v615 = vpop.permute.xlu0 %614
    %617 = vst.msk [vmem:[#allocation2 + $0x8] sm:$0xc0] %vm394, %v615
    %v618 = vld [vmem:[#allocation2] sm:$0xff]
    %v619 = vld [vmem:[#allocation2 + $0x8] sm:$0xff]
    %v620 = vld [vmem:[#allocation9] sm:$0xff]
    %v621 = vld [vmem:[#allocation9 + $0x8] sm:$0xff]
    %v622 = vld [vmem:[#allocation9 + $0x10] sm:$0xff]
    %v623 = vld [vmem:[#allocation9 + $0x18] sm:$0xff]
    %v624 = vld [vmem:[#allocation11] sm:$0xff]
    %v625 = vld [vmem:[#allocation11 + $0x8] sm:$0xff]
    %v626 = vld [vmem:[#allocation11 + $0x10] sm:$0xff]
    %v627 = vld [vmem:[#allocation11 + $0x18] sm:$0xff]
    %v628 = vld [vmem:[%s6] sm:$0x1]
    %v630 = vperm.slane %v628, 0
    %v633 = vsel %vm172, %v618, 0
    %v636 = vsel %vm172, %v619, 0
    %638 = vmatpush.msra.mxu0 0.0
    %639 = vmatpush.msra.mxu0 0.0
    %640 = vmatpush.msra.mxu0 0.0
    %641 = vmatpush.msra.mxu0 0.0
    %642 = vmatpush.msra.mxu0 0.0
    %643 = vmatpush.msra.mxu0 0.0
    %644 = vmatpush.msra.mxu0 0.0
    %645 = vmatpush.msra.mxu0 0.0
    %646 = vmatpush.msra.mxu0 0.0
    %647 = vmatpush.msra.mxu0 0.0
    %648 = vmatpush.msra.mxu0 0.0
    %649 = vmatpush.msra.mxu0 0.0
    %650 = vmatpush.msra.mxu0 %v623
    %651 = vmatpush.msra.mxu0 %v622
    %652 = vmatpush.msra.mxu0 %v621
    %653 = vmatpush.msra.mxu0 %v620
    %654 = vmatmul.f32.gmra.mxu0 %v633
    %v655 = vpop.f32.mrf.mxu0
    %v656 = vadd.f32 %v630, %v655
    %657 = vmatmul.f32.gmra.mxu0 %v636
    %v658 = vpop.f32.mrf.mxu0
    %v659 = vadd.f32 %v630, %v658
    %660 = vdwg.mxu0
    %661 = vmatpush.msra.mxu0 0.0
    %662 = vmatpush.msra.mxu0 0.0
    %663 = vmatpush.msra.mxu0 0.0
    %664 = vmatpush.msra.mxu0 0.0
    %665 = vmatpush.msra.mxu0 0.0
    %666 = vmatpush.msra.mxu0 0.0
    %667 = vmatpush.msra.mxu0 0.0
    %668 = vmatpush.msra.mxu0 0.0
    %669 = vmatpush.msra.mxu0 0.0
    %670 = vmatpush.msra.mxu0 0.0
    %671 = vmatpush.msra.mxu0 0.0
    %672 = vmatpush.msra.mxu0 0.0
    %673 = vmatpush.msra.mxu0 %v627
    %674 = vmatpush.msra.mxu0 %v626
    %675 = vmatpush.msra.mxu0 %v625
    %676 = vmatpush.msra.mxu0 %v624
    %677 = vmatmul.f32.gmra.mxu0 %v174
    %v678 = vpop.f32.mrf.mxu0
    %v679 = vadd.f32 0.0, %v678
    %680 = vdwg.mxu0
    %v681 = vadd.f32 %v656, %v679
    %v682 = vtanh.pop %v681
    %v683 = vmul.f32 %v682, %v198
    %v684 = vadd.f32 %v683, %v200
    %v685 = vmul.f32 %v684, 0.0
    %687 = vrot.lane.b32.xlu0 %v684, 32
    %v688 = vpop.permute.xlu0 %687
    %v690 = vmul.f32 %v684, %v688
    %692 = vrot.lane.b32.xlu0 %v690, 32
    %v693 = vpop.permute.xlu0 %692
    %v695 = vadd.f32 %v685, %v693
    %v696 = vtanh.pop %v695
    %698 = vrot.lane.b32.xlu0 %v696, 32
    %v699 = vpop.permute.xlu0 %698
    %v701 = vmul.f32 %v684, %v699
    %703 = vrot.lane.b32.xlu0 %v701, 64
    %v704 = vpop.permute.xlu0 %703
    %706 = vst.msk [vmem:[#allocation2] sm:$0x3] %vm223, %v704
    %v707 = vsel %vm172, %v704, 0
    %709 = vmatpush.msra.mxu0 0.0
    %710 = vmatpush.msra.mxu0 0.0
    %711 = vmatpush.msra.mxu0 0.0
    %712 = vmatpush.msra.mxu0 0.0
    %713 = vmatpush.msra.mxu0 0.0
    %714 = vmatpush.msra.mxu0 0.0
    %715 = vmatpush.msra.mxu0 0.0
    %716 = vmatpush.msra.mxu0 0.0
    %717 = vmatpush.msra.mxu0 0.0
    %718 = vmatpush.msra.mxu0 0.0
    %719 = vmatpush.msra.mxu0 0.0
    %720 = vmatpush.msra.mxu0 0.0
    %721 = vmatpush.msra.mxu0 %v627
    %722 = vmatpush.msra.mxu0 %v626
    %723 = vmatpush.msra.mxu0 %v625
    %724 = vmatpush.msra.mxu0 %v624
    %725 = vmatmul.f32.gmra.mxu0 %v707
    %v726 = vpop.f32.mrf.mxu0
    %v727 = vadd.f32 0.0, %v726
    %728 = vdwg.mxu0
    %v730 = vrot.slane %v727, 6
    %v732 = vadd.f32 %v656, %v730
    %v733 = vtanh.pop %v732
    %v734 = vmul.f32 %v733, %v198
    %v735 = vadd.f32 %v734, %v200
    %v737 = vrot.slane %v695, 6
    %v739 = vmul.f32 %v735, %v737
    %741 = vrot.lane.b32.xlu0 %v735, 32
    %v742 = vpop.permute.xlu0 %741
    %v744 = vmul.f32 %v735, %v742
    %746 = vrot.lane.b32.xlu0 %v744, 32
    %v747 = vpop.permute.xlu0 %746
    %v749 = vadd.f32 %v739, %v747
    %v750 = vtanh.pop %v749
    %752 = vrot.lane.b32.xlu0 %v750, 32
    %v753 = vpop.permute.xlu0 %752
    %v755 = vmul.f32 %v735, %v753
    %757 = vrot.lane.b32.xlu0 %v755, 64
    %v758 = vpop.permute.xlu0 %757
    %760 = vst.msk [vmem:[#allocation2] sm:$0xc] %vm278, %v758
    %v761 = vrot.slane %v755, 2
    %762 = vrot.lane.b32.xlu0 %v761, 64
    %v763 = vpop.permute.xlu0 %762
    %v764 = vsel %vm172, %v763, 0
    %766 = vmatpush.msra.mxu0 0.0
    %767 = vmatpush.msra.mxu0 0.0
    %768 = vmatpush.msra.mxu0 0.0
    %769 = vmatpush.msra.mxu0 0.0
    %770 = vmatpush.msra.mxu0 0.0
    %771 = vmatpush.msra.mxu0 0.0
    %772 = vmatpush.msra.mxu0 0.0
    %773 = vmatpush.msra.mxu0 0.0
    %774 = vmatpush.msra.mxu0 0.0
    %775 = vmatpush.msra.mxu0 0.0
    %776 = vmatpush.msra.mxu0 0.0
    %777 = vmatpush.msra.mxu0 0.0
    %778 = vmatpush.msra.mxu0 %v627
    %779 = vmatpush.msra.mxu0 %v626
    %780 = vmatpush.msra.mxu0 %v625
    %781 = vmatpush.msra.mxu0 %v624
    %782 = vmatmul.f32.gmra.mxu0 %v764
    %v783 = vpop.f32.mrf.mxu0
    %v784 = vadd.f32 0.0, %v783
    %785 = vdwg.mxu0
    %v787 = vrot.slane %v784, 4
    %v789 = vadd.f32 %v656, %v787
    %v790 = vtanh.pop %v789
    %v791 = vmul.f32 %v790, %v198
    %v792 = vadd.f32 %v791, %v200
    %v794 = vrot.slane %v749, 6
    %v796 = vmul.f32 %v792, %v794
    %798 = vrot.lane.b32.xlu0 %v792, 32
    %v799 = vpop.permute.xlu0 %798
    %v801 = vmul.f32 %v792, %v799
    %803 = vrot.lane.b32.xlu0 %v801, 32
    %v804 = vpop.permute.xlu0 %803
    %v806 = vadd.f32 %v796, %v804
    %v807 = vtanh.pop %v806
    %809 = vrot.lane.b32.xlu0 %v807, 32
    %v810 = vpop.permute.xlu0 %809
    %v812 = vmul.f32 %v792, %v810
    %814 = vrot.lane.b32.xlu0 %v812, 64
    %v815 = vpop.permute.xlu0 %814
    %817 = vst.msk [vmem:[#allocation2] sm:$0x30] %vm336, %v815
    %v818 = vrot.slane %v812, 4
    %819 = vrot.lane.b32.xlu0 %v818, 64
    %v820 = vpop.permute.xlu0 %819
    %v821 = vsel %vm172, %v820, 0
    %823 = vmatpush.msra.mxu0 0.0
    %824 = vmatpush.msra.mxu0 0.0
    %825 = vmatpush.msra.mxu0 0.0
    %826 = vmatpush.msra.mxu0 0.0
    %827 = vmatpush.msra.mxu0 0.0
    %828 = vmatpush.msra.mxu0 0.0
    %829 = vmatpush.msra.mxu0 0.0
    %830 = vmatpush.msra.mxu0 0.0
    %831 = vmatpush.msra.mxu0 0.0
    %832 = vmatpush.msra.mxu0 0.0
    %833 = vmatpush.msra.mxu0 0.0
    %834 = vmatpush.msra.mxu0 0.0
    %835 = vmatpush.msra.mxu0 %v627
    %836 = vmatpush.msra.mxu0 %v626
    %837 = vmatpush.msra.mxu0 %v625
    %838 = vmatpush.msra.mxu0 %v624
    %839 = vmatmul.f32.gmra.mxu0 %v821
    %v840 = vpop.f32.mrf.mxu0
    %v841 = vadd.f32 0.0, %v840
    %842 = vdwg.mxu0
    %v844 = vrot.slane %v841, 2
    %v846 = vadd.f32 %v656, %v844
    %v847 = vtanh.pop %v846
    %v848 = vmul.f32 %v847, %v198
    %v849 = vadd.f32 %v848, %v200
    %v851 = vrot.slane %v806, 6
    %v853 = vmul.f32 %v849, %v851
    %855 = vrot.lane.b32.xlu0 %v849, 32
    %v856 = vpop.permute.xlu0 %855
    %v858 = vmul.f32 %v849, %v856
    %860 = vrot.lane.b32.xlu0 %v858, 32
    %v861 = vpop.permute.xlu0 %860
    %v863 = vadd.f32 %v853, %v861
    %v864 = vtanh.pop %v863
    %866 = vrot.lane.b32.xlu0 %v864, 32
    %v867 = vpop.permute.xlu0 %866
    %v869 = vmul.f32 %v849, %v867
    %871 = vrot.lane.b32.xlu0 %v869, 64
    %v872 = vpop.permute.xlu0 %871
    %874 = vst.msk [vmem:[#allocation2] sm:$0xc0] %vm394, %v872
    %v875 = vrot.slane %v869, 6
    %876 = vrot.lane.b32.xlu0 %v875, 64
    %v877 = vpop.permute.xlu0 %876
    %v878 = vsel %vm172, %v877, 0
    %880 = vmatpush.msra.mxu0 0.0
    %881 = vmatpush.msra.mxu0 0.0
    %882 = vmatpush.msra.mxu0 0.0
    %883 = vmatpush.msra.mxu0 0.0
    %884 = vmatpush.msra.mxu0 0.0
    %885 = vmatpush.msra.mxu0 0.0
    %886 = vmatpush.msra.mxu0 0.0
    %887 = vmatpush.msra.mxu0 0.0
    %888 = vmatpush.msra.mxu0 0.0
    %889 = vmatpush.msra.mxu0 0.0
    %890 = vmatpush.msra.mxu0 0.0
    %891 = vmatpush.msra.mxu0 0.0
    %892 = vmatpush.msra.mxu0 %v627
    %893 = vmatpush.msra.mxu0 %v626
    %894 = vmatpush.msra.mxu0 %v625
    %895 = vmatpush.msra.mxu0 %v624
    %896 = vmatmul.f32.gmra.mxu0 %v878
    %v897 = vpop.f32.mrf.mxu0
    %v898 = vadd.f32 0.0, %v897
    %899 = vdwg.mxu0
    %v900 = vadd.f32 %v659, %v898
    %v901 = vtanh.pop %v900
    %v902 = vmul.f32 %v901, %v198
    %v903 = vadd.f32 %v902, %v200
    %v905 = vrot.slane %v863, 6
    %v907 = vmul.f32 %v903, %v905
    %909 = vrot.lane.b32.xlu0 %v903, 32
    %v910 = vpop.permute.xlu0 %909
    %v912 = vmul.f32 %v903, %v910
    %914 = vrot.lane.b32.xlu0 %v912, 32
    %v915 = vpop.permute.xlu0 %914
    %v917 = vadd.f32 %v907, %v915
    %v918 = vtanh.pop %v917
    %920 = vrot.lane.b32.xlu0 %v918, 32
    %v921 = vpop.permute.xlu0 %920
    %v923 = vmul.f32 %v903, %v921
    %925 = vrot.lane.b32.xlu0 %v923, 64
    %v926 = vpop.permute.xlu0 %925
    %928 = vst.msk [vmem:[#allocation2 + $0x8] sm:$0x3] %vm223, %v926
    %v929 = vsel %vm172, %v926, 0
    %931 = vmatpush.msra.mxu0 0.0
    %932 = vmatpush.msra.mxu0 0.0
    %933 = vmatpush.msra.mxu0 0.0
    %934 = vmatpush.msra.mxu0 0.0
    %935 = vmatpush.msra.mxu0 0.0
    %936 = vmatpush.msra.mxu0 0.0
    %937 = vmatpush.msra.mxu0 0.0
    %938 = vmatpush.msra.mxu0 0.0
    %939 = vmatpush.msra.mxu0 0.0
    %940 = vmatpush.msra.mxu0 0.0
    %941 = vmatpush.msra.mxu0 0.0
    %942 = vmatpush.msra.mxu0 0.0
    %943 = vmatpush.msra.mxu0 %v627
    %944 = vmatpush.msra.mxu0 %v626
    %945 = vmatpush.msra.mxu0 %v625
    %946 = vmatpush.msra.mxu0 %v624
    %947 = vmatmul.f32.gmra.mxu0 %v929
    %v948 = vpop.f32.mrf.mxu0
    %v949 = vadd.f32 0.0, %v948
    %950 = vdwg.mxu0
    %v952 = vrot.slane %v949, 6
    %v954 = vadd.f32 %v659, %v952
    %v955 = vtanh.pop %v954
    %v956 = vmul.f32 %v955, %v198
    %v957 = vadd.f32 %v956, %v200
    %v959 = vrot.slane %v917, 6
    %v961 = vmul.f32 %v957, %v959
    %963 = vrot.lane.b32.xlu0 %v957, 32
    %v964 = vpop.permute.xlu0 %963
    %v966 = vmul.f32 %v957, %v964
    %968 = vrot.lane.b32.xlu0 %v966, 32
    %v969 = vpop.permute.xlu0 %968
    %v971 = vadd.f32 %v961, %v969
    %v972 = vtanh.pop %v971
    %974 = vrot.lane.b32.xlu0 %v972, 32
    %v975 = vpop.permute.xlu0 %974
    %v977 = vmul.f32 %v957, %v975
    %979 = vrot.lane.b32.xlu0 %v977, 64
    %v980 = vpop.permute.xlu0 %979
    %982 = vst.msk [vmem:[#allocation2 + $0x8] sm:$0xc] %vm278, %v980
    %v983 = vrot.slane %v977, 2
    %984 = vrot.lane.b32.xlu0 %v983, 64
    %v985 = vpop.permute.xlu0 %984
    %v986 = vsel %vm172, %v985, 0
    %988 = vmatpush.msra.mxu0 0.0
    %989 = vmatpush.msra.mxu0 0.0
    %990 = vmatpush.msra.mxu0 0.0
    %991 = vmatpush.msra.mxu0 0.0
    %992 = vmatpush.msra.mxu0 0.0
    %993 = vmatpush.msra.mxu0 0.0
    %994 = vmatpush.msra.mxu0 0.0
    %995 = vmatpush.msra.mxu0 0.0
    %996 = vmatpush.msra.mxu0 0.0
    %997 = vmatpush.msra.mxu0 0.0
    %998 = vmatpush.msra.mxu0 0.0
    %999 = vmatpush.msra.mxu0 0.0
    %1000 = vmatpush.msra.mxu0 %v627
    %1001 = vmatpush.msra.mxu0 %v626
    %1002 = vmatpush.msra.mxu0 %v625
    %1003 = vmatpush.msra.mxu0 %v624
    %1004 = vmatmul.f32.gmra.mxu0 %v986
    %v1005 = vpop.f32.mrf.mxu0
    %v1006 = vadd.f32 0.0, %v1005
    %1007 = vdwg.mxu0
    %v1009 = vrot.slane %v1006, 4
    %v1011 = vadd.f32 %v659, %v1009
    %v1012 = vtanh.pop %v1011
    %v1013 = vmul.f32 %v1012, %v198
    %v1014 = vadd.f32 %v1013, %v200
    %v1016 = vrot.slane %v971, 6
    %v1018 = vmul.f32 %v1014, %v1016
    %1020 = vrot.lane.b32.xlu0 %v1014, 32
    %v1021 = vpop.permute.xlu0 %1020
    %v1023 = vmul.f32 %v1014, %v1021
    %1025 = vrot.lane.b32.xlu0 %v1023, 32
    %v1026 = vpop.permute.xlu0 %1025
    %v1028 = vadd.f32 %v1018, %v1026
    %v1029 = vtanh.pop %v1028
    %1031 = vrot.lane.b32.xlu0 %v1029, 32
    %v1032 = vpop.permute.xlu0 %1031
    %v1034 = vmul.f32 %v1014, %v1032
    %1036 = vrot.lane.b32.xlu0 %v1034, 64
    %v1037 = vpop.permute.xlu0 %1036
    %1039 = vst.msk [vmem:[#allocation2 + $0x8] sm:$0x30] %vm336, %v1037
    %v1040 = vrot.slane %v1034, 4
    %1041 = vrot.lane.b32.xlu0 %v1040, 64
    %v1042 = vpop.permute.xlu0 %1041
    %v1043 = vsel %vm172, %v1042, 0
    %1045 = vmatpush.msra.mxu0 0.0
    %1046 = vmatpush.msra.mxu0 0.0
    %1047 = vmatpush.msra.mxu0 0.0
    %1048 = vmatpush.msra.mxu0 0.0
    %1049 = vmatpush.msra.mxu0 0.0
    %1050 = vmatpush.msra.mxu0 0.0
    %1051 = vmatpush.msra.mxu0 0.0
    %1052 = vmatpush.msra.mxu0 0.0
    %1053 = vmatpush.msra.mxu0 0.0
    %1054 = vmatpush.msra.mxu0 0.0
    %1055 = vmatpush.msra.mxu0 0.0
    %1056 = vmatpush.msra.mxu0 0.0
    %1057 = vmatpush.msra.mxu0 %v627
    %1058 = vmatpush.msra.mxu0 %v626
    %1059 = vmatpush.msra.mxu0 %v625
    %1060 = vmatpush.msra.mxu0 %v624
    %1061 = vmatmul.f32.gmra.mxu0 %v1043
    %v1062 = vpop.f32.mrf.mxu0
    %v1063 = vadd.f32 0.0, %v1062
    %1064 = vdwg.mxu0
    %v1066 = vrot.slane %v1063, 2
    %v1068 = vadd.f32 %v659, %v1066
    %v1069 = vtanh.pop %v1068
    %v1070 = vmul.f32 %v1069, %v198
    %v1071 = vadd.f32 %v1070, %v200
    %v1073 = vrot.slane %v1028, 6
    %v1075 = vmul.f32 %v1071, %v1073
    %1077 = vrot.lane.b32.xlu0 %v1071, 32
    %v1078 = vpop.permute.xlu0 %1077
    %v1080 = vmul.f32 %v1071, %v1078
    %1082 = vrot.lane.b32.xlu0 %v1080, 32
    %v1083 = vpop.permute.xlu0 %1082
    %v1085 = vadd.f32 %v1075, %v1083
    %v1086 = vtanh.pop %v1085
    %1088 = vrot.lane.b32.xlu0 %v1086, 32
    %v1089 = vpop.permute.xlu0 %1088
    %v1091 = vmul.f32 %v1071, %v1089
    %1093 = vrot.lane.b32.xlu0 %v1091, 64
    %v1094 = vpop.permute.xlu0 %1093
    %1096 = vst.msk [vmem:[#allocation2 + $0x8] sm:$0xc0] %vm394, %v1094
    %v1097 = vld [vmem:[#allocation2] sm:$0xff]
    %v1098 = vld [vmem:[#allocation2 + $0x8] sm:$0xff]
    %v1099 = vld [vmem:[#allocation12] sm:$0xff]
    %v1100 = vld [vmem:[#allocation12 + $0x8] sm:$0xff]
    %v1101 = vld [vmem:[#allocation12 + $0x10] sm:$0xff]
    %v1102 = vld [vmem:[#allocation12 + $0x18] sm:$0xff]
    %v1103 = vld [vmem:[%s8] sm:$0x1]
    %v1105 = vperm.slane %v1103, 0
    %v1108 = vsel %vm172, %v1097, 0
    %v1111 = vsel %vm172, %v1098, 0
    %1113 = vmatpush.msra.mxu0 0.0
    %1114 = vmatpush.msra.mxu0 0.0
    %1115 = vmatpush.msra.mxu0 0.0
    %1116 = vmatpush.msra.mxu0 0.0
    %1117 = vmatpush.msra.mxu0 0.0
    %1118 = vmatpush.msra.mxu0 0.0
    %1119 = vmatpush.msra.mxu0 0.0
    %1120 = vmatpush.msra.mxu0 0.0
    %1121 = vmatpush.msra.mxu0 0.0
    %1122 = vmatpush.msra.mxu0 0.0
    %1123 = vmatpush.msra.mxu0 0.0
    %1124 = vmatpush.msra.mxu0 0.0
    %1125 = vmatpush.msra.mxu0 %v1102
    %1126 = vmatpush.msra.mxu0 %v1101
    %1127 = vmatpush.msra.mxu0 %v1100
    %1128 = vmatpush.msra.mxu0 %v1099
    %1129 = vmatmul.f32.gmra.mxu0 %v1108
    %v1130 = vpop.f32.mrf.mxu0
    %v1131 = vadd.f32 %v1105, %v1130
    %1132 = vmatmul.f32.gmra.mxu0 %v1111
    %v1133 = vpop.f32.mrf.mxu0
    %v1134 = vadd.f32 %v1105, %v1133
    %1135 = vdwg.mxu0
    %1136 = vst [vmem:[#allocation14] sm:$0xff] %v1131
    %1137 = vst [vmem:[#allocation14 + $0x8] sm:$0xff] %v1134
    // Predicated region
    $region62: #{tpu_custom_call.1} parent=1 // pred_check
      _
    $region63: #{tpu_custom_call.1} parent=1 // pred_check_branch
      %1139 = sbr.rel (0) target = $region65
    $region64: #{tpu_custom_call.1} parent=1 // pred_region
      %1141 = vsyncadd [#allocation5], 0
      %s1142 = sshll.u32 [#allocation14], 4
      %s1143 = int_to_ptr.vmem [resolvable:$true] %s1142
      %s1144 = sshll.u32 %s9, 4
      %s1145 = int_to_ptr.hbm [resolvable:$true] %s1144
      %1150 = dma.vmem_to_hbm [thread:$0]  %s1143, 256, %s1145, [#allocation5], 128, 128, 8
    $region65: #{tpu_custom_call.1} parent=1 // pred_fallthru
      _
    // Predicated region
    $region66: #{tpu_custom_call.1} parent=1 // pred_check
      _
    $region67: #{tpu_custom_call.1} parent=1 // pred_check_branch
      %1152 = sbr.rel (0) target = $region69
    $region68: #{tpu_custom_call.1} parent=1 // pred_region
      %1154 = dma.done [#allocation5], 256
    $region69: #{tpu_custom_call.1} parent=1 // pred_fallthru
      _
    %1155 = vsyncpa [#allocation4], 1
    %1156 = vsyncpa [#allocation7], 1
    %1157 = vsyncpa [#allocation10], 1
    %1158 = vsyncpa [#allocation13], 1
    %1159 = vsyncpa [#allocation5], 1

</llo_original>
